<compile_context>
chip_gen: v7x
topology: tpu7x:2x2x1
jax: 0.10.0
libtpu: 0.0.40
codegen_flags: <defaults>
</compile_context>

<pallas_src>
import math
from functools import partial

import jax
import jax.numpy as jnp
from jax.experimental import pallas as pl
from jax.experimental.pallas import tpu as pltpu


# ----------------------------- kernel ---------------------------------------

def _layer_norm_f32(x, w, b, eps=1e-5):
    # fp32 LayerNorm over the last dim (matches the fp16-safe LayerNorm subclass).
    x32 = x.astype(jnp.float32)
    mu = jnp.mean(x32, axis=-1, keepdims=True)
    var = jnp.mean((x32 - mu) ** 2, axis=-1, keepdims=True)
    return (x32 - mu) * jax.lax.rsqrt(var + eps) * w + b


def fused_transformer_kernel(n_head,
                             x_ref, mask_ref,
                             ln1w_ref, ln1b_ref,
                             wqkv_ref, bqkv_ref,
                             wo_ref, bo_ref,
                             ln2w_ref, ln2b_ref,
                             wfc_ref, bfc_ref,
                             wpr_ref, bpr_ref,
                             o_ref,
                             attn_scratch):
    l = pl.program_id(1)

    # Layer 0: load this batch row's input into the resident output block.
    @pl.when(l == 0)
    def _():
        o_ref[0] = x_ref[0]

    x = o_ref[0]                                   # (S, D) fp32, resident across layers
    S, D = x.shape
    hd = D // n_head
    scale = 1.0 / math.sqrt(hd)

    mask = mask_ref[...]                           # (S, S) fp32 additive mask

    # ---------------- attention branch: x + MHA(LN1(x)) ----------------
    h = _layer_norm_f32(x, ln1w_ref[0], ln1b_ref[0])          # (S, D) fp32
    # packed qkv projection (weights pre-transposed to (D, 3D), bf16)
    qkv = jnp.dot(h.astype(jnp.bfloat16), wqkv_ref[0],
                  preferred_element_type=jnp.float32) + bqkv_ref[0]   # (S, 3D) fp32
    q = (qkv[:, 0 * D:1 * D] * scale).astype(jnp.bfloat16)
    k = qkv[:, 1 * D:2 * D].astype(jnp.bfloat16)
    v = qkv[:, 2 * D:3 * D].astype(jnp.bfloat16)

    for hh in range(n_head):                       # static loop over heads
        lo, hi = hh * hd, (hh + 1) * hd
        # scores: q_h @ k_h^T via dot_general (contract last dims, no explicit transpose)
        sc = jax.lax.dot_general(q[:, lo:hi], k[:, lo:hi],
                                 (((1,), (1,)), ((), ())),
                                 preferred_element_type=jnp.float32)  # (S, S)
        sc = sc + mask
        sc = sc - jnp.max(sc, axis=-1, keepdims=True)
        p = jnp.exp(sc)
        inv = pl.reciprocal(jnp.sum(p, axis=-1, keepdims=True), approx=True)
        p = p * inv
        attn_scratch[:, lo:hi] = jnp.dot(p.astype(jnp.bfloat16), v[:, lo:hi],
                                         preferred_element_type=jnp.float32)

    attn = jnp.dot(attn_scratch[...].astype(jnp.bfloat16), wo_ref[0],
                   preferred_element_type=jnp.float32) + bo_ref[0]
    x = x + attn

    # ---------------- MLP branch: x + c_proj(QuickGELU(c_fc(LN2(x)))) ----------------
    h2 = _layer_norm_f32(x, ln2w_ref[0], ln2b_ref[0])
    f = jnp.dot(h2.astype(jnp.bfloat16), wfc_ref[0],
                preferred_element_type=jnp.float32) + bfc_ref[0]
    f = f * jax.nn.sigmoid(1.702 * f)              # QuickGELU (fp32)
    f = jnp.dot(f.astype(jnp.bfloat16), wpr_ref[0],
                preferred_element_type=jnp.float32) + bpr_ref[0]

    o_ref[0] = x + f


# ----------------------------- wrapper ---------------------------------------

def _prepare_params(layer_params):
    """Stack per-layer params along a leading L axis, pre-transpose weights to
    lane-dense (in, out) layout, cast weights to bf16 (LN/bias stay fp32)."""
    def stack(i):
        return jnp.stack([p[i] for p in layer_params], axis=0)

    ln1w = stack(0).astype(jnp.float32)[:, None, :]                  # (L, 1, D)
    ln1b = stack(1).astype(jnp.float32)[:, None, :]
    wqkv = jnp.swapaxes(stack(2), 1, 2).astype(jnp.bfloat16)         # (L, D, 3D)
    bqkv = stack(3).astype(jnp.float32)[:, None, :]                  # (L, 1, 3D)
    wo = jnp.swapaxes(stack(4), 1, 2).astype(jnp.bfloat16)           # (L, D, D)
    bo = stack(5).astype(jnp.float32)[:, None, :]                    # (L, 1, D)
    ln2w = stack(6).astype(jnp.float32)[:, None, :]
    ln2b = stack(7).astype(jnp.float32)[:, None, :]
    wfc = jnp.swapaxes(stack(8), 1, 2).astype(jnp.bfloat16)          # (L, D, 4D)
    bfc = stack(9).astype(jnp.float32)[:, None, :]                   # (L, 1, 4D)
    wpr = jnp.swapaxes(stack(10), 1, 2).astype(jnp.bfloat16)         # (L, 4D, D)
    bpr = stack(11).astype(jnp.float32)[:, None, :]                  # (L, 1, D)
    return (ln1w, ln1b, wqkv, bqkv, wo, bo, ln2w, ln2b, wfc, bfc, wpr, bpr)


def transformer_forward(x_sbd, layer_params, n_head, attn_mask=None):
    """Matches Transformer.forward: x is (seq, batch, width), returns same shape.
    attn_mask: optional additive (S, S) float mask (same as nn.MultiheadAttention)."""
    S, B, D = x_sbd.shape
    L = len(layer_params)
    x_bsd = jnp.transpose(x_sbd, (1, 0, 2)).astype(jnp.float32)
    prepared = _prepare_params(layer_params)

    if attn_mask is None:
        mask = jnp.zeros((S, S), jnp.float32)
    else:
        mask = attn_mask.astype(jnp.float32)

    def wspec(arr):
        # per-layer block of a stacked (L, r, c) param; index only by layer l.
        return pl.BlockSpec((1,) + arr.shape[1:], lambda b, l: (l, 0, 0))

    kernel = partial(fused_transformer_kernel, n_head)
    grid_spec = pltpu.PrefetchScalarGridSpec(
        num_scalar_prefetch=0,
        grid=(B, L),                                   # layer axis innermost
        in_specs=[pl.BlockSpec((1, S, D), lambda b, l: (b, 0, 0)),   # x
                  pl.BlockSpec((S, S), lambda b, l: (0, 0))]         # mask
                 + [wspec(a) for a in prepared],
        out_specs=pl.BlockSpec((1, S, D), lambda b, l: (b, 0, 0)),   # resident over l
        scratch_shapes=[pltpu.VMEM((S, D), jnp.float32)],            # per-head slab
    )
    out = pl.pallas_call(
        kernel,
        out_shape=jax.ShapeDtypeStruct((B, S, D), jnp.float32),
        grid_spec=grid_spec,
        compiler_params=pltpu.CompilerParams(
            dimension_semantics=("parallel", "arbitrary"),
            vmem_limit_bytes=32 * 1024 * 1024),
    )(x_bsd, mask, *prepared)
    return jnp.transpose(out, (1, 0, 2)).astype(x_sbd.dtype)


# ----------------------------- param init ------------------------------------

def init_layer_params(key, width):
    """Params in PyTorch layout: weights (out, in), biases / LN params 1-D."""
    D = width
    ks = jax.random.split(key, 6)
    s = 0.02
    ln1w = jnp.ones((D,), jnp.float32)
    ln1b = jnp.zeros((D,), jnp.float32)
    wqkv = (s * jax.random.normal(ks[0], (3 * D, D))).astype(jnp.float32)
    bqkv = (s * jax.random.normal(ks[1], (3 * D,))).astype(jnp.float32)
    wo = (s * jax.random.normal(ks[2], (D, D))).astype(jnp.float32)
    bo = jnp.zeros((D,), jnp.float32)
    ln2w = jnp.ones((D,), jnp.float32)
    ln2b = jnp.zeros((D,), jnp.float32)
    wfc = (s * jax.random.normal(ks[3], (4 * D, D))).astype(jnp.float32)
    bfc = (s * jax.random.normal(ks[4], (4 * D,))).astype(jnp.float32)
    wpr = (s * jax.random.normal(ks[5], (D, 4 * D))).astype(jnp.float32)
    bpr = jnp.zeros((D,), jnp.float32)
    return (ln1w, ln1b, wqkv, bqkv, wo, bo, ln2w, ln2b, wfc, bfc, wpr, bpr)


# ----------------------------- pure-JAX reference -----------------------------

def _ref_block(x_bsd, params, n_head, mask):
    (ln1w, ln1b, wqkv, bqkv, wo, bo, ln2w, ln2b, wfc, bfc, wpr, bpr) = params
    B, S, D = x_bsd.shape
    hd = D // n_head

    def ln(x, w, b):
        mu = jnp.mean(x, -1, keepdims=True)
        var = jnp.mean((x - mu) ** 2, -1, keepdims=True)
        return (x - mu) * jax.lax.rsqrt(var + 1e-5) * w + b

    h = ln(x_bsd, ln1w, ln1b)
    qkv = h @ wqkv.T + bqkv
    q, k, v = qkv[..., :D], qkv[..., D:2 * D], qkv[..., 2 * D:]
    q = q.reshape(B, S, n_head, hd).transpose(0, 2, 1, 3) / math.sqrt(hd)
    k = k.reshape(B, S, n_head, hd).transpose(0, 2, 1, 3)
    v = v.reshape(B, S, n_head, hd).transpose(0, 2, 1, 3)
    sc = jnp.einsum("bhqd,bhkd->bhqk", q, k) + mask
    p = jax.nn.softmax(sc, axis=-1)
    a = jnp.einsum("bhqk,bhkd->bhqd", p, v).transpose(0, 2, 1, 3).reshape(B, S, D)
    x = x_bsd + (a @ wo.T + bo)
    h2 = ln(x, ln2w, ln2b)
    f = h2 @ wfc.T + bfc
    f = f * jax.nn.sigmoid(1.702 * f)
    return x + (f @ wpr.T + bpr)


def _ref_transformer(x_sbd, layer_params, n_head, attn_mask=None):
    S, B, D = x_sbd.shape
    mask = jnp.zeros((S, S), jnp.float32) if attn_mask is None else attn_mask.astype(jnp.float32)
    x = jnp.transpose(x_sbd, (1, 0, 2)).astype(jnp.float32)
    for p in layer_params:
        x = _ref_block(x, p, n_head, mask)
    return jnp.transpose(x, (1, 0, 2))


# ----------------------------- main -------------------------------------------

if __name__ == "__main__":
    SEQ, BATCH, WIDTH, HEADS, LAYERS = 8, 2, 32, 4, 2

    key = jax.random.PRNGKey(0)
    kx, kp = jax.random.split(key)
    x = jax.random.normal(kx, (SEQ, BATCH, WIDTH), dtype=jnp.float32)

    layer_keys = jax.random.split(kp, LAYERS)
    layer_params = [init_layer_params(k, WIDTH) for k in layer_keys]

    # 1) default attn_mask=None (matches Transformer(..., attn_mask=None))
    out = transformer_forward(x, layer_params, HEADS)
    out = jax.block_until_ready(out)
    assert out.shape == (SEQ, BATCH, WIDTH)
    ref = _ref_transformer(x, layer_params, HEADS)
    assert jnp.allclose(out, ref, atol=3e-2, rtol=3e-2), "mismatch (no mask) vs reference"

    # 2) CLIP-style causal additive mask
    causal = jnp.where(jnp.tril(jnp.ones((SEQ, SEQ), dtype=bool)),
                       jnp.float32(0.0), jnp.float32(-jnp.inf))
    out_m = transformer_forward(x, layer_params, HEADS, attn_mask=causal)
    out_m = jax.block_until_ready(out_m)
    ref_m = _ref_transformer(x, layer_params, HEADS, attn_mask=causal)
    assert jnp.allclose(out_m, ref_m, atol=3e-2, rtol=3e-2), "mismatch (causal mask) vs reference"

    print("KERNEL_OK")
</pallas_src>

<mosaic_0001>
module attributes {stable_mosaic.version = 11 : i64} {
  func.func @fused_transformer_kernel(%arg0: i32, %arg1: i32, %arg2: memref<1x8x32xf32, #tpu.memory_space<vmem>>, %arg3: memref<8x8xf32, #tpu.memory_space<vmem>>, %arg4: memref<1x1x32xf32, #tpu.memory_space<vmem>>, %arg5: memref<1x1x32xf32, #tpu.memory_space<vmem>>, %arg6: memref<1x32x96xbf16, #tpu.memory_space<vmem>>, %arg7: memref<1x1x96xf32, #tpu.memory_space<vmem>>, %arg8: memref<1x32x32xbf16, #tpu.memory_space<vmem>>, %arg9: memref<1x1x32xf32, #tpu.memory_space<vmem>>, %arg10: memref<1x1x32xf32, #tpu.memory_space<vmem>>, %arg11: memref<1x1x32xf32, #tpu.memory_space<vmem>>, %arg12: memref<1x32x128xbf16, #tpu.memory_space<vmem>>, %arg13: memref<1x1x128xf32, #tpu.memory_space<vmem>>, %arg14: memref<1x128x32xbf16, #tpu.memory_space<vmem>>, %arg15: memref<1x1x32xf32, #tpu.memory_space<vmem>>, %arg16: memref<1x8x32xf32, #tpu.memory_space<vmem>>, %arg17: memref<8x32xf32, #tpu.memory_space<vmem>>) attributes {dimension_semantics = [#tpu.dimension_semantics<parallel>, #tpu.dimension_semantics<arbitrary>], iteration_bounds = array<i64: 2, 2>, scalar_prefetch = 0 : i64, scratch_operands = 1 : i64, tpu.core_type = #tpu.core_type<tc>, window_params = [{transform_indices = @transform_0, window_bounds = array<i64: 1, 8, 32>}, {pipeline_mode = #tpu.pipeline_mode<synchronous>, transform_indices = @transform_1, window_bounds = array<i64: 8, 8>}, {transform_indices = @transform_2, window_bounds = array<i64: 1, 1, 32>}, {transform_indices = @transform_3, window_bounds = array<i64: 1, 1, 32>}, {transform_indices = @transform_4, window_bounds = array<i64: 1, 32, 96>}, {transform_indices = @transform_5, window_bounds = array<i64: 1, 1, 96>}, {transform_indices = @transform_6, window_bounds = array<i64: 1, 32, 32>}, {transform_indices = @transform_7, window_bounds = array<i64: 1, 1, 32>}, {transform_indices = @transform_8, window_bounds = array<i64: 1, 1, 32>}, {transform_indices = @transform_9, window_bounds = array<i64: 1, 1, 32>}, {transform_indices = @transform_10, window_bounds = array<i64: 1, 32, 128>}, {transform_indices = @transform_11, window_bounds = array<i64: 1, 1, 128>}, {transform_indices = @transform_12, window_bounds = array<i64: 1, 128, 32>}, {transform_indices = @transform_13, window_bounds = array<i64: 1, 1, 32>}, {transform_indices = @transform_14, window_bounds = array<i64: 1, 8, 32>}]} {
    %c0_i32 = arith.constant 0 : i32
    %0 = arith.cmpi eq, %arg1, %c0_i32 : i32
    %1 = arith.extui %0 : i1 to i32
    %c0_i32_0 = arith.constant 0 : i32
    %2 = arith.cmpi ne, %1, %c0_i32_0 : i32
    scf.if %2 {
      %c0_83 = arith.constant 0 : index
      %c0_84 = arith.constant 0 : index
      %c0_85 = arith.constant 0 : index
      %184 = vector.load %arg2[%c0_83, %c0_84, %c0_85] : memref<1x8x32xf32, #tpu.memory_space<vmem>>, vector<1x8x32xf32>
      %185 = vector.shape_cast %184 : vector<1x8x32xf32> to vector<8x32xf32>
      %c0_86 = arith.constant 0 : index
      %c0_87 = arith.constant 0 : index
      %c0_88 = arith.constant 0 : index
      %186 = vector.load %arg16[%c0_86, %c0_87, %c0_88] : memref<1x8x32xf32, #tpu.memory_space<vmem>>, vector<1x8x32xf32>
      %187 = vector.shape_cast %186 : vector<1x8x32xf32> to vector<8x32xf32>
      %188 = vector.shape_cast %185 : vector<8x32xf32> to vector<1x8x32xf32>
      tpu.vector_store %arg16[%c0_86, %c0_87, %c0_88], %188 {strides = array<i32>} : memref<1x8x32xf32, #tpu.memory_space<vmem>>, vector<1x8x32xf32>,
    } else {
    }
    %c0 = arith.constant 0 : index
    %c0_1 = arith.constant 0 : index
    %c0_2 = arith.constant 0 : index
    %3 = vector.load %arg16[%c0, %c0_1, %c0_2] : memref<1x8x32xf32, #tpu.memory_space<vmem>>, vector<1x8x32xf32>
    %4 = vector.shape_cast %3 : vector<1x8x32xf32> to vector<8x32xf32>
    %c0_3 = arith.constant 0 : index
    %c0_4 = arith.constant 0 : index
    %5 = vector.load %arg3[%c0_3, %c0_4] : memref<8x8xf32, #tpu.memory_space<vmem>>, vector<8x8xf32>
    %c0_5 = arith.constant 0 : index
    %c0_6 = arith.constant 0 : index
    %c0_7 = arith.constant 0 : index
    %6 = vector.load %arg4[%c0_5, %c0_6, %c0_7] : memref<1x1x32xf32, #tpu.memory_space<vmem>>, vector<1x1x32xf32>
    %7 = vector.shape_cast %6 : vector<1x1x32xf32> to vector<1x32xf32>
    %c0_8 = arith.constant 0 : index
    %c0_9 = arith.constant 0 : index
    %c0_10 = arith.constant 0 : index
    %8 = vector.load %arg5[%c0_8, %c0_9, %c0_10] : memref<1x1x32xf32, #tpu.memory_space<vmem>>, vector<1x1x32xf32>
    %9 = vector.shape_cast %8 : vector<1x1x32xf32> to vector<1x32xf32>
    %cst = arith.constant dense<0.000000e+00> : vector<8xf32>
    %10 = vector.multi_reduction <add>, %4, %cst [1] : vector<8x32xf32> to vector<8xf32>
    %11 = vector.shape_cast %10 : vector<8xf32> to vector<8x1xf32>
    %cst_11 = arith.constant 3.200000e+01 : f32
    %12 = vector.broadcast %cst_11 : f32 to vector<8x1xf32>
    %13 = arith.divf %11, %12 : vector<8x1xf32>
    %14 = vector.broadcast %13 : vector<8x1xf32> to vector<8x32xf32>
    %15 = arith.subf %4, %14 : vector<8x32xf32>
    %16 = arith.mulf %15, %15 : vector<8x32xf32>
    %cst_12 = arith.constant dense<0.000000e+00> : vector<8xf32>
    %17 = vector.multi_reduction <add>, %16, %cst_12 [1] : vector<8x32xf32> to vector<8xf32>
    %18 = vector.shape_cast %17 : vector<8xf32> to vector<8x1xf32>
    %cst_13 = arith.constant 3.200000e+01 : f32
    %19 = vector.broadcast %cst_13 : f32 to vector<8x1xf32>
    %20 = arith.divf %18, %19 : vector<8x1xf32>
    %21 = vector.broadcast %13 : vector<8x1xf32> to vector<8x32xf32>
    %22 = arith.subf %4, %21 : vector<8x32xf32>
    %cst_14 = arith.constant 9.99999974E-6 : f32
    %23 = vector.broadcast %cst_14 : f32 to vector<8x1xf32>
    %24 = arith.addf %20, %23 : vector<8x1xf32>
    %25 = math.rsqrt %24 : vector<8x1xf32>
    %26 = vector.broadcast %25 : vector<8x1xf32> to vector<8x32xf32>
    %27 = arith.mulf %22, %26 : vector<8x32xf32>
    %28 = vector.broadcast %7 : vector<1x32xf32> to vector<8x32xf32>
    %29 = arith.mulf %27, %28 : vector<8x32xf32>
    %30 = vector.broadcast %9 : vector<1x32xf32> to vector<8x32xf32>
    %31 = arith.addf %29, %30 : vector<8x32xf32>
    %32 = arith.truncf %31 : vector<8x32xf32> to vector<8x32xbf16>
    %c0_15 = arith.constant 0 : index
    %c0_16 = arith.constant 0 : index
    %c0_17 = arith.constant 0 : index
    %33 = vector.load %arg6[%c0_15, %c0_16, %c0_17] : memref<1x32x96xbf16, #tpu.memory_space<vmem>>, vector<1x32x96xbf16>
    %34 = vector.shape_cast %33 : vector<1x32x96xbf16> to vector<32x96xbf16>
    %cst_18 = arith.constant dense<0.000000e+00> : vector<8x96xf32>
    %35 = tpu.matmul %32, %34, %cst_18 {dimension_numbers = #tpu.dot_dimension_numbers<[1], [0], [0], [1], [0, 0, 1, 1], [], []>} : vector<8x32xbf16>, vector<32x96xbf16>, vector<8x96xf32> -> vector<8x96xf32>
    %c0_19 = arith.constant 0 : index
    %c0_20 = arith.constant 0 : index
    %c0_21 = arith.constant 0 : index
    %36 = vector.load %arg7[%c0_19, %c0_20, %c0_21] : memref<1x1x96xf32, #tpu.memory_space<vmem>>, vector<1x1x96xf32>
    %37 = vector.shape_cast %36 : vector<1x1x96xf32> to vector<1x96xf32>
    %38 = vector.broadcast %37 : vector<1x96xf32> to vector<8x96xf32>
    %39 = arith.addf %35, %38 : vector<8x96xf32>
    %40 = vector.extract_strided_slice %39 {offsets = [0, 0], sizes = [8, 32], strides = [1, 1]} : vector<8x96xf32> to vector<8x32xf32>
    %cst_22 = arith.constant 0.353553385 : f32
    %41 = vector.broadcast %cst_22 : f32 to vector<8x32xf32>
    %42 = arith.mulf %40, %41 : vector<8x32xf32>
    %43 = arith.truncf %42 : vector<8x32xf32> to vector<8x32xbf16>
    %44 = vector.extract_strided_slice %39 {offsets = [0, 32], sizes = [8, 32], strides = [1, 1]} : vector<8x96xf32> to vector<8x32xf32>
    %45 = arith.truncf %44 : vector<8x32xf32> to vector<8x32xbf16>
    %46 = vector.extract_strided_slice %39 {offsets = [0, 64], sizes = [8, 32], strides = [1, 1]} : vector<8x96xf32> to vector<8x32xf32>
    %47 = arith.truncf %46 : vector<8x32xf32> to vector<8x32xbf16>
    %48 = vector.extract_strided_slice %43 {offsets = [0, 0], sizes = [8, 8], strides = [1, 1]} : vector<8x32xbf16> to vector<8x8xbf16>
    %49 = vector.extract_strided_slice %45 {offsets = [0, 0], sizes = [8, 8], strides = [1, 1]} : vector<8x32xbf16> to vector<8x8xbf16>
    %cst_23 = arith.constant dense<0.000000e+00> : vector<8x8xf32>
    %50 = tpu.matmul %48, %49, %cst_23 {dimension_numbers = #tpu.dot_dimension_numbers<[1], [1], [0], [0], [0, 0, 1, 0], [], []>} : vector<8x8xbf16>, vector<8x8xbf16>, vector<8x8xf32> -> vector<8x8xf32>
    %51 = arith.addf %50, %5 : vector<8x8xf32>
    %cst_24 = arith.constant dense<0xFF800000> : vector<8xf32>
    %52 = vector.multi_reduction <maximumf>, %51, %cst_24 [1] : vector<8x8xf32> to vector<8xf32>
    %53 = vector.shape_cast %52 : vector<8xf32> to vector<8x1xf32>
    %54 = vector.broadcast %53 : vector<8x1xf32> to vector<8x8xf32>
    %55 = arith.subf %51, %54 : vector<8x8xf32>
    %56 = math.exp %55 : vector<8x8xf32>
    %cst_25 = arith.constant dense<0.000000e+00> : vector<8xf32>
    %57 = vector.multi_reduction <add>, %56, %cst_25 [1] : vector<8x8xf32> to vector<8xf32>
    %58 = vector.shape_cast %57 : vector<8xf32> to vector<8x1xf32>
    %59 = tpu.reciprocal %58 {approx = true} : vector<8x1xf32> -> vector<8x1xf32>
    %60 = vector.broadcast %59 : vector<8x1xf32> to vector<8x8xf32>
    %61 = arith.mulf %56, %60 : vector<8x8xf32>
    %62 = arith.truncf %61 : vector<8x8xf32> to vector<8x8xbf16>
    %63 = vector.extract_strided_slice %47 {offsets = [0, 0], sizes = [8, 8], strides = [1, 1]} : vector<8x32xbf16> to vector<8x8xbf16>
    %cst_26 = arith.constant dense<0.000000e+00> : vector<8x8xf32>
    %64 = tpu.matmul %62, %63, %cst_26 {dimension_numbers = #tpu.dot_dimension_numbers<[1], [0], [0], [1], [0, 0, 1, 1], [], []>} : vector<8x8xbf16>, vector<8x8xbf16>, vector<8x8xf32> -> vector<8x8xf32>
    %c0_27 = arith.constant 0 : index
    %c0_28 = arith.constant 0 : index
    %65 = vector.load %arg17[%c0_27, %c0_28] : memref<8x32xf32, #tpu.memory_space<vmem>>, vector<8x8xf32>
    tpu.vector_store %arg17[%c0_27, %c0_28], %64 {strides = array<i32>} : memref<8x32xf32, #tpu.memory_space<vmem>>, vector<8x8xf32>,
    %66 = vector.extract_strided_slice %43 {offsets = [0, 8], sizes = [8, 8], strides = [1, 1]} : vector<8x32xbf16> to vector<8x8xbf16>
    %67 = vector.extract_strided_slice %45 {offsets = [0, 8], sizes = [8, 8], strides = [1, 1]} : vector<8x32xbf16> to vector<8x8xbf16>
    %cst_29 = arith.constant dense<0.000000e+00> : vector<8x8xf32>
    %68 = tpu.matmul %66, %67, %cst_29 {dimension_numbers = #tpu.dot_dimension_numbers<[1], [1], [0], [0], [0, 0, 1, 0], [], []>} : vector<8x8xbf16>, vector<8x8xbf16>, vector<8x8xf32> -> vector<8x8xf32>
    %69 = arith.addf %68, %5 : vector<8x8xf32>
    %cst_30 = arith.constant dense<0xFF800000> : vector<8xf32>
    %70 = vector.multi_reduction <maximumf>, %69, %cst_30 [1] : vector<8x8xf32> to vector<8xf32>
    %71 = vector.shape_cast %70 : vector<8xf32> to vector<8x1xf32>
    %72 = vector.broadcast %71 : vector<8x1xf32> to vector<8x8xf32>
    %73 = arith.subf %69, %72 : vector<8x8xf32>
    %74 = math.exp %73 : vector<8x8xf32>
    %cst_31 = arith.constant dense<0.000000e+00> : vector<8xf32>
    %75 = vector.multi_reduction <add>, %74, %cst_31 [1] : vector<8x8xf32> to vector<8xf32>
    %76 = vector.shape_cast %75 : vector<8xf32> to vector<8x1xf32>
    %77 = tpu.reciprocal %76 {approx = true} : vector<8x1xf32> -> vector<8x1xf32>
    %78 = vector.broadcast %77 : vector<8x1xf32> to vector<8x8xf32>
    %79 = arith.mulf %74, %78 : vector<8x8xf32>
    %80 = arith.truncf %79 : vector<8x8xf32> to vector<8x8xbf16>
    %81 = vector.extract_strided_slice %47 {offsets = [0, 8], sizes = [8, 8], strides = [1, 1]} : vector<8x32xbf16> to vector<8x8xbf16>
    %cst_32 = arith.constant dense<0.000000e+00> : vector<8x8xf32>
    %82 = tpu.matmul %80, %81, %cst_32 {dimension_numbers = #tpu.dot_dimension_numbers<[1], [0], [0], [1], [0, 0, 1, 1], [], []>} : vector<8x8xbf16>, vector<8x8xbf16>, vector<8x8xf32> -> vector<8x8xf32>
    %c0_33 = arith.constant 0 : index
    %c8 = arith.constant 8 : index
    %83 = vector.load %arg17[%c0_33, %c8] : memref<8x32xf32, #tpu.memory_space<vmem>>, vector<8x8xf32>
    tpu.vector_store %arg17[%c0_33, %c8], %82 {strides = array<i32>} : memref<8x32xf32, #tpu.memory_space<vmem>>, vector<8x8xf32>,
    %84 = vector.extract_strided_slice %43 {offsets = [0, 16], sizes = [8, 8], strides = [1, 1]} : vector<8x32xbf16> to vector<8x8xbf16>
    %85 = vector.extract_strided_slice %45 {offsets = [0, 16], sizes = [8, 8], strides = [1, 1]} : vector<8x32xbf16> to vector<8x8xbf16>
    %cst_34 = arith.constant dense<0.000000e+00> : vector<8x8xf32>
    %86 = tpu.matmul %84, %85, %cst_34 {dimension_numbers = #tpu.dot_dimension_numbers<[1], [1], [0], [0], [0, 0, 1, 0], [], []>} : vector<8x8xbf16>, vector<8x8xbf16>, vector<8x8xf32> -> vector<8x8xf32>
    %87 = arith.addf %86, %5 : vector<8x8xf32>
    %cst_35 = arith.constant dense<0xFF800000> : vector<8xf32>
    %88 = vector.multi_reduction <maximumf>, %87, %cst_35 [1] : vector<8x8xf32> to vector<8xf32>
    %89 = vector.shape_cast %88 : vector<8xf32> to vector<8x1xf32>
    %90 = vector.broadcast %89 : vector<8x1xf32> to vector<8x8xf32>
    %91 = arith.subf %87, %90 : vector<8x8xf32>
    %92 = math.exp %91 : vector<8x8xf32>
    %cst_36 = arith.constant dense<0.000000e+00> : vector<8xf32>
    %93 = vector.multi_reduction <add>, %92, %cst_36 [1] : vector<8x8xf32> to vector<8xf32>
    %94 = vector.shape_cast %93 : vector<8xf32> to vector<8x1xf32>
    %95 = tpu.reciprocal %94 {approx = true} : vector<8x1xf32> -> vector<8x1xf32>
    %96 = vector.broadcast %95 : vector<8x1xf32> to vector<8x8xf32>
    %97 = arith.mulf %92, %96 : vector<8x8xf32>
    %98 = arith.truncf %97 : vector<8x8xf32> to vector<8x8xbf16>
    %99 = vector.extract_strided_slice %47 {offsets = [0, 16], sizes = [8, 8], strides = [1, 1]} : vector<8x32xbf16> to vector<8x8xbf16>
    %cst_37 = arith.constant dense<0.000000e+00> : vector<8x8xf32>
    %100 = tpu.matmul %98, %99, %cst_37 {dimension_numbers = #tpu.dot_dimension_numbers<[1], [0], [0], [1], [0, 0, 1, 1], [], []>} : vector<8x8xbf16>, vector<8x8xbf16>, vector<8x8xf32> -> vector<8x8xf32>
    %c0_38 = arith.constant 0 : index
    %c16 = arith.constant 16 : index
    %101 = vector.load %arg17[%c0_38, %c16] : memref<8x32xf32, #tpu.memory_space<vmem>>, vector<8x8xf32>
    tpu.vector_store %arg17[%c0_38, %c16], %100 {strides = array<i32>} : memref<8x32xf32, #tpu.memory_space<vmem>>, vector<8x8xf32>,
    %102 = vector.extract_strided_slice %43 {offsets = [0, 24], sizes = [8, 8], strides = [1, 1]} : vector<8x32xbf16> to vector<8x8xbf16>
    %103 = vector.extract_strided_slice %45 {offsets = [0, 24], sizes = [8, 8], strides = [1, 1]} : vector<8x32xbf16> to vector<8x8xbf16>
    %cst_39 = arith.constant dense<0.000000e+00> : vector<8x8xf32>
    %104 = tpu.matmul %102, %103, %cst_39 {dimension_numbers = #tpu.dot_dimension_numbers<[1], [1], [0], [0], [0, 0, 1, 0], [], []>} : vector<8x8xbf16>, vector<8x8xbf16>, vector<8x8xf32> -> vector<8x8xf32>
    %105 = arith.addf %104, %5 : vector<8x8xf32>
    %cst_40 = arith.constant dense<0xFF800000> : vector<8xf32>
    %106 = vector.multi_reduction <maximumf>, %105, %cst_40 [1] : vector<8x8xf32> to vector<8xf32>
    %107 = vector.shape_cast %106 : vector<8xf32> to vector<8x1xf32>
    %108 = vector.broadcast %107 : vector<8x1xf32> to vector<8x8xf32>
    %109 = arith.subf %105, %108 : vector<8x8xf32>
    %110 = math.exp %109 : vector<8x8xf32>
    %cst_41 = arith.constant dense<0.000000e+00> : vector<8xf32>
    %111 = vector.multi_reduction <add>, %110, %cst_41 [1] : vector<8x8xf32> to vector<8xf32>
    %112 = vector.shape_cast %111 : vector<8xf32> to vector<8x1xf32>
    %113 = tpu.reciprocal %112 {approx = true} : vector<8x1xf32> -> vector<8x1xf32>
    %114 = vector.broadcast %113 : vector<8x1xf32> to vector<8x8xf32>
    %115 = arith.mulf %110, %114 : vector<8x8xf32>
    %116 = arith.truncf %115 : vector<8x8xf32> to vector<8x8xbf16>
    %117 = vector.extract_strided_slice %47 {offsets = [0, 24], sizes = [8, 8], strides = [1, 1]} : vector<8x32xbf16> to vector<8x8xbf16>
    %cst_42 = arith.constant dense<0.000000e+00> : vector<8x8xf32>
    %118 = tpu.matmul %116, %117, %cst_42 {dimension_numbers = #tpu.dot_dimension_numbers<[1], [0], [0], [1], [0, 0, 1, 1], [], []>} : vector<8x8xbf16>, vector<8x8xbf16>, vector<8x8xf32> -> vector<8x8xf32>
    %c0_43 = arith.constant 0 : index
    %c24 = arith.constant 24 : index
    %119 = vector.load %arg17[%c0_43, %c24] : memref<8x32xf32, #tpu.memory_space<vmem>>, vector<8x8xf32>
    tpu.vector_store %arg17[%c0_43, %c24], %118 {strides = array<i32>} : memref<8x32xf32, #tpu.memory_space<vmem>>, vector<8x8xf32>,
    %c0_44 = arith.constant 0 : index
    %c0_45 = arith.constant 0 : index
    %120 = vector.load %arg17[%c0_44, %c0_45] : memref<8x32xf32, #tpu.memory_space<vmem>>, vector<8x32xf32>
    %121 = arith.truncf %120 : vector<8x32xf32> to vector<8x32xbf16>
    %c0_46 = arith.constant 0 : index
    %c0_47 = arith.constant 0 : index
    %c0_48 = arith.constant 0 : index
    %122 = vector.load %arg8[%c0_46, %c0_47, %c0_48] : memref<1x32x32xbf16, #tpu.memory_space<vmem>>, vector<1x32x32xbf16>
    %123 = vector.shape_cast %122 : vector<1x32x32xbf16> to vector<32x32xbf16>
    %cst_49 = arith.constant dense<0.000000e+00> : vector<8x32xf32>
    %124 = tpu.matmul %121, %123, %cst_49 {dimension_numbers = #tpu.dot_dimension_numbers<[1], [0], [0], [1], [0, 0, 1, 1], [], []>} : vector<8x32xbf16>, vector<32x32xbf16>, vector<8x32xf32> -> vector<8x32xf32>
    %c0_50 = arith.constant 0 : index
    %c0_51 = arith.constant 0 : index
    %c0_52 = arith.constant 0 : index
    %125 = vector.load %arg9[%c0_50, %c0_51, %c0_52] : memref<1x1x32xf32, #tpu.memory_space<vmem>>, vector<1x1x32xf32>
    %126 = vector.shape_cast %125 : vector<1x1x32xf32> to vector<1x32xf32>
    %127 = vector.broadcast %126 : vector<1x32xf32> to vector<8x32xf32>
    %128 = arith.addf %124, %127 : vector<8x32xf32>
    %129 = arith.addf %4, %128 : vector<8x32xf32>
    %c0_53 = arith.constant 0 : index
    %c0_54 = arith.constant 0 : index
    %c0_55 = arith.constant 0 : index
    %130 = vector.load %arg10[%c0_53, %c0_54, %c0_55] : memref<1x1x32xf32, #tpu.memory_space<vmem>>, vector<1x1x32xf32>
    %131 = vector.shape_cast %130 : vector<1x1x32xf32> to vector<1x32xf32>
    %c0_56 = arith.constant 0 : index
    %c0_57 = arith.constant 0 : index
    %c0_58 = arith.constant 0 : index
    %132 = vector.load %arg11[%c0_56, %c0_57, %c0_58] : memref<1x1x32xf32, #tpu.memory_space<vmem>>, vector<1x1x32xf32>
    %133 = vector.shape_cast %132 : vector<1x1x32xf32> to vector<1x32xf32>
    %cst_59 = arith.constant dense<0.000000e+00> : vector<8xf32>
    %134 = vector.multi_reduction <add>, %129, %cst_59 [1] : vector<8x32xf32> to vector<8xf32>
    %135 = vector.shape_cast %134 : vector<8xf32> to vector<8x1xf32>
    %cst_60 = arith.constant 3.200000e+01 : f32
    %136 = vector.broadcast %cst_60 : f32 to vector<8x1xf32>
    %137 = arith.divf %135, %136 : vector<8x1xf32>
    %138 = vector.broadcast %137 : vector<8x1xf32> to vector<8x32xf32>
    %139 = arith.subf %129, %138 : vector<8x32xf32>
    %140 = arith.mulf %139, %139 : vector<8x32xf32>
    %cst_61 = arith.constant dense<0.000000e+00> : vector<8xf32>
    %141 = vector.multi_reduction <add>, %140, %cst_61 [1] : vector<8x32xf32> to vector<8xf32>
    %142 = vector.shape_cast %141 : vector<8xf32> to vector<8x1xf32>
    %cst_62 = arith.constant 3.200000e+01 : f32
    %143 = vector.broadcast %cst_62 : f32 to vector<8x1xf32>
    %144 = arith.divf %142, %143 : vector<8x1xf32>
    %145 = vector.broadcast %137 : vector<8x1xf32> to vector<8x32xf32>
    %146 = arith.subf %129, %145 : vector<8x32xf32>
    %cst_63 = arith.constant 9.99999974E-6 : f32
    %147 = vector.broadcast %cst_63 : f32 to vector<8x1xf32>
    %148 = arith.addf %144, %147 : vector<8x1xf32>
    %149 = math.rsqrt %148 : vector<8x1xf32>
    %150 = vector.broadcast %149 : vector<8x1xf32> to vector<8x32xf32>
    %151 = arith.mulf %146, %150 : vector<8x32xf32>
    %152 = vector.broadcast %131 : vector<1x32xf32> to vector<8x32xf32>
    %153 = arith.mulf %151, %152 : vector<8x32xf32>
    %154 = vector.broadcast %133 : vector<1x32xf32> to vector<8x32xf32>
    %155 = arith.addf %153, %154 : vector<8x32xf32>
    %156 = arith.truncf %155 : vector<8x32xf32> to vector<8x32xbf16>
    %c0_64 = arith.constant 0 : index
    %c0_65 = arith.constant 0 : index
    %c0_66 = arith.constant 0 : index
    %157 = vector.load %arg12[%c0_64, %c0_65, %c0_66] : memref<1x32x128xbf16, #tpu.memory_space<vmem>>, vector<1x32x128xbf16>
    %158 = vector.shape_cast %157 : vector<1x32x128xbf16> to vector<32x128xbf16>
    %cst_67 = arith.constant dense<0.000000e+00> : vector<8x128xf32>
    %159 = tpu.matmul %156, %158, %cst_67 {dimension_numbers = #tpu.dot_dimension_numbers<[1], [0], [0], [1], [0, 0, 1, 1], [], []>} : vector<8x32xbf16>, vector<32x128xbf16>, vector<8x128xf32> -> vector<8x128xf32>
    %c0_68 = arith.constant 0 : index
    %c0_69 = arith.constant 0 : index
    %c0_70 = arith.constant 0 : index
    %160 = vector.load %arg13[%c0_68, %c0_69, %c0_70] : memref<1x1x128xf32, #tpu.memory_space<vmem>>, vector<1x1x128xf32>
    %161 = vector.shape_cast %160 : vector<1x1x128xf32> to vector<1x128xf32>
    %162 = vector.broadcast %161 : vector<1x128xf32> to vector<8x128xf32>
    %163 = arith.addf %159, %162 : vector<8x128xf32>
    %cst_71 = arith.constant 1.702000e+00 : f32
    %164 = vector.broadcast %cst_71 : f32 to vector<8x128xf32>
    %165 = arith.mulf %164, %163 : vector<8x128xf32>
    %166 = arith.negf %165 : vector<8x128xf32>
    %167 = math.exp %166 : vector<8x128xf32>
    %cst_72 = arith.constant 1.000000e+00 : f32
    %168 = vector.broadcast %cst_72 : f32 to vector<8x128xf32>
    %169 = arith.addf %168, %167 : vector<8x128xf32>
    %170 = arith.divf %168, %169 : vector<8x128xf32>
    %171 = arith.mulf %163, %170 : vector<8x128xf32>
    %172 = arith.truncf %171 : vector<8x128xf32> to vector<8x128xbf16>
    %c0_73 = arith.constant 0 : index
    %c0_74 = arith.constant 0 : index
    %c0_75 = arith.constant 0 : index
    %173 = vector.load %arg14[%c0_73, %c0_74, %c0_75] : memref<1x128x32xbf16, #tpu.memory_space<vmem>>, vector<1x128x32xbf16>
    %174 = vector.shape_cast %173 : vector<1x128x32xbf16> to vector<128x32xbf16>
    %cst_76 = arith.constant dense<0.000000e+00> : vector<8x32xf32>
    %175 = tpu.matmul %172, %174, %cst_76 {dimension_numbers = #tpu.dot_dimension_numbers<[1], [0], [0], [1], [0, 0, 1, 1], [], []>} : vector<8x128xbf16>, vector<128x32xbf16>, vector<8x32xf32> -> vector<8x32xf32>
    %c0_77 = arith.constant 0 : index
    %c0_78 = arith.constant 0 : index
    %c0_79 = arith.constant 0 : index
    %176 = vector.load %arg15[%c0_77, %c0_78, %c0_79] : memref<1x1x32xf32, #tpu.memory_space<vmem>>, vector<1x1x32xf32>
    %177 = vector.shape_cast %176 : vector<1x1x32xf32> to vector<1x32xf32>
    %178 = vector.broadcast %177 : vector<1x32xf32> to vector<8x32xf32>
    %179 = arith.addf %175, %178 : vector<8x32xf32>
    %180 = arith.addf %129, %179 : vector<8x32xf32>
    %c0_80 = arith.constant 0 : index
    %c0_81 = arith.constant 0 : index
    %c0_82 = arith.constant 0 : index
    %181 = vector.load %arg16[%c0_80, %c0_81, %c0_82] : memref<1x8x32xf32, #tpu.memory_space<vmem>>, vector<1x8x32xf32>
    %182 = vector.shape_cast %181 : vector<1x8x32xf32> to vector<8x32xf32>
    %183 = vector.shape_cast %180 : vector<8x32xf32> to vector<1x8x32xf32>
    tpu.vector_store %arg16[%c0_80, %c0_81, %c0_82], %183 {strides = array<i32>} : memref<1x8x32xf32, #tpu.memory_space<vmem>>, vector<1x8x32xf32>,
    return
  }
  func.func @transform_0(%arg0: i32, %arg1: i32) -> (i32, i32, i32) {
    %c0_i32 = arith.constant 0 : i32
    %c0_i32_0 = arith.constant 0 : i32
    %c0_i32_1 = arith.constant 0 : i32
    return %arg0, %c0_i32, %c0_i32_0 : i32, i32, i32
  }
  func.func @transform_1(%arg0: i32, %arg1: i32) -> (i32, i32) {
    %c0_i32 = arith.constant 0 : i32
    %c0_i32_0 = arith.constant 0 : i32
    %c0_i32_1 = arith.constant 0 : i32
    return %c0_i32, %c0_i32_0 : i32, i32
  }
  func.func @transform_2(%arg0: i32, %arg1: i32) -> (i32, i32, i32) {
    %c0_i32 = arith.constant 0 : i32
    %c0_i32_0 = arith.constant 0 : i32
    %c0_i32_1 = arith.constant 0 : i32
    return %arg1, %c0_i32, %c0_i32_0 : i32, i32, i32
  }
  func.func @transform_3(%arg0: i32, %arg1: i32) -> (i32, i32, i32) {
    %c0_i32 = arith.constant 0 : i32
    %c0_i32_0 = arith.constant 0 : i32
    %c0_i32_1 = arith.constant 0 : i32
    return %arg1, %c0_i32, %c0_i32_0 : i32, i32, i32
  }
  func.func @transform_4(%arg0: i32, %arg1: i32) -> (i32, i32, i32) {
    %c0_i32 = arith.constant 0 : i32
    %c0_i32_0 = arith.constant 0 : i32
    %c0_i32_1 = arith.constant 0 : i32
    return %arg1, %c0_i32, %c0_i32_0 : i32, i32, i32
  }
  func.func @transform_5(%arg0: i32, %arg1: i32) -> (i32, i32, i32) {
    %c0_i32 = arith.constant 0 : i32
    %c0_i32_0 = arith.constant 0 : i32
    %c0_i32_1 = arith.constant 0 : i32
    return %arg1, %c0_i32, %c0_i32_0 : i32, i32, i32
  }
  func.func @transform_6(%arg0: i32, %arg1: i32) -> (i32, i32, i32) {
    %c0_i32 = arith.constant 0 : i32
    %c0_i32_0 = arith.constant 0 : i32
    %c0_i32_1 = arith.constant 0 : i32
    return %arg1, %c0_i32, %c0_i32_0 : i32, i32, i32
  }
  func.func @transform_7(%arg0: i32, %arg1: i32) -> (i32, i32, i32) {
    %c0_i32 = arith.constant 0 : i32
    %c0_i32_0 = arith.constant 0 : i32
    %c0_i32_1 = arith.constant 0 : i32
    return %arg1, %c0_i32, %c0_i32_0 : i32, i32, i32
  }
  func.func @transform_8(%arg0: i32, %arg1: i32) -> (i32, i32, i32) {
    %c0_i32 = arith.constant 0 : i32
    %c0_i32_0 = arith.constant 0 : i32
    %c0_i32_1 = arith.constant 0 : i32
    return %arg1, %c0_i32, %c0_i32_0 : i32, i32, i32
  }
  func.func @transform_9(%arg0: i32, %arg1: i32) -> (i32, i32, i32) {
    %c0_i32 = arith.constant 0 : i32
    %c0_i32_0 = arith.constant 0 : i32
    %c0_i32_1 = arith.constant 0 : i32
    return %arg1, %c0_i32, %c0_i32_0 : i32, i32, i32
  }
  func.func @transform_10(%arg0: i32, %arg1: i32) -> (i32, i32, i32) {
    %c0_i32 = arith.constant 0 : i32
    %c0_i32_0 = arith.constant 0 : i32
    %c0_i32_1 = arith.constant 0 : i32
    return %arg1, %c0_i32, %c0_i32_0 : i32, i32, i32
  }
  func.func @transform_11(%arg0: i32, %arg1: i32) -> (i32, i32, i32) {
    %c0_i32 = arith.constant 0 : i32
    %c0_i32_0 = arith.constant 0 : i32
    %c0_i32_1 = arith.constant 0 : i32
    return %arg1, %c0_i32, %c0_i32_0 : i32, i32, i32
  }
  func.func @transform_12(%arg0: i32, %arg1: i32) -> (i32, i32, i32) {
    %c0_i32 = arith.constant 0 : i32
    %c0_i32_0 = arith.constant 0 : i32
    %c0_i32_1 = arith.constant 0 : i32
    return %arg1, %c0_i32, %c0_i32_0 : i32, i32, i32
  }
  func.func @transform_13(%arg0: i32, %arg1: i32) -> (i32, i32, i32) {
    %c0_i32 = arith.constant 0 : i32
    %c0_i32_0 = arith.constant 0 : i32
    %c0_i32_1 = arith.constant 0 : i32
    return %arg1, %c0_i32, %c0_i32_0 : i32, i32, i32
  }
  func.func @transform_14(%arg0: i32, %arg1: i32) -> (i32, i32, i32) {
    %c0_i32 = arith.constant 0 : i32
    %c0_i32_0 = arith.constant 0 : i32
    %c0_i32_1 = arith.constant 0 : i32
    return %arg0, %c0_i32, %c0_i32_0 : i32, i32, i32
  }
}

</mosaic_0001>

<llo_original>
// kernel: tpu_custom_call.1
$region0: #{tpu_custom_call.1}
  #allocation0 [shape = 'u32[]', space=smem, size = 0x4, offset = 0x4, fixed_abs, tag = 'smem constant byte address 0x4 - core index']
  #allocation1 [shape = 'u32[144,128]{1,0:T(1,128)}', space=vmem, size = 0x12000, scoped, tag = 'internal scratch']
  #allocation2 [shape = 'f32[8,32]{1,0:T(8,128)}', space=vmem, size = 0x1000, scoped, tag = 'scratch operand']
  %s0 = inlined_call_operand.vmem [shape: f32[2,8,32], index: 0, kind: input, shape index: {}]
  %s1 = inlined_call_operand.vmem [shape: f32[8,8], index: 1, kind: input, shape index: {}]
  %s2 = inlined_call_operand.vmem [shape: f32[2,1,32], index: 2, kind: input, shape index: {}]
  %s3 = inlined_call_operand.vmem [shape: f32[2,1,32], index: 3, kind: input, shape index: {}]
  %s4 = inlined_call_operand.vmem [shape: bf16[2,32,96], index: 4, kind: input, shape index: {}]
  %s5 = inlined_call_operand.vmem [shape: f32[2,1,96], index: 5, kind: input, shape index: {}]
  %s6 = inlined_call_operand.vmem [shape: bf16[2,32,32], index: 6, kind: input, shape index: {}]
  %s7 = inlined_call_operand.vmem [shape: f32[2,1,32], index: 7, kind: input, shape index: {}]
  %s8 = inlined_call_operand.vmem [shape: f32[2,1,32], index: 8, kind: input, shape index: {}]
  %s9 = inlined_call_operand.vmem [shape: f32[2,1,32], index: 9, kind: input, shape index: {}]
  %s10 = inlined_call_operand.vmem [shape: bf16[2,32,128], index: 10, kind: input, shape index: {}]
  %s11 = inlined_call_operand.vmem [shape: f32[2,1,128], index: 11, kind: input, shape index: {}]
  %s12 = inlined_call_operand.vmem [shape: bf16[2,128,32], index: 12, kind: input, shape index: {}]
  %s13 = inlined_call_operand.vmem [shape: f32[2,1,32], index: 13, kind: input, shape index: {}]
  %s14 = inlined_call_operand.hbm [shape: f32[2,8,32], index: 14, kind: output, shape index: {}]
  %s15 = sld [smem:[#allocation0]]
  $region93: #{tpu_custom_call.1} parent=0
    _
  %s17 = ssub.s32 1, %s15
  %s18 = scalar_select 0, %s17, %s15
  $region1: #{tpu_custom_call.1} parent=0
    #allocation3 [shape = 'u8[8192]{0}', space=vmem, size = 0x2000, scoped, tag = 'output window, operand 0']
    #allocation4 [shape = 's32[2]{0}', space=sflag, size = 0x8, scoped, tag = 'scoped memory for tpu_custom_call.1']
    %19 = vsyncpa [#allocation4], 0
    %s20 = scalar_lea.sflag [#allocation4], 1
    %21 = vsyncpa %s20, 0
    loop: start=0, step=1, limit=6
    $region2: #{tpu_custom_call.1} parent=1 // loop_pre_header
      _
    $region3: #{tpu_custom_call.1} parent=1 // loop_header
      %s23 = sphi 0, %s27
      %p24 = scmp.ge.s32.totalorder %s23, 6
      %s30 = sphi 0, %s42
      %s31 = sphi 0, %s38
      %s32 = sphi 0, %s30
      %s33 = sphi 0, %s31
      %s34 = sphi 0, %s32
      %s35 = sphi 0, %s33
      %s45 = sphi 0, %s47
      %s48 = sphi 0, %s45
      %s49 = sphi 0, %s48
      %s65 = sphi 0, %s49
      %s69 = sphi 0, %s69
      %s71 = sphi 0, %s69
      %s72 = sphi 0, %s71
      %s86 = sphi 0, %s72
      %s92 = sphi 0, %s94
      %s95 = sphi 0, %s92
      %s96 = sphi 0, %s95
      %s112 = sphi 0, %s96
      %s118 = sphi 0, %s120
      %s121 = sphi 0, %s118
      %s122 = sphi 0, %s121
      %s138 = sphi 0, %s122
      %s144 = sphi 0, %s146
      %s147 = sphi 0, %s144
      %s148 = sphi 0, %s147
      %s164 = sphi 0, %s148
      %s170 = sphi 0, %s172
      %s173 = sphi 0, %s170
      %s174 = sphi 0, %s173
      %s190 = sphi 0, %s174
      %s196 = sphi 0, %s198
      %s199 = sphi 0, %s196
      %s200 = sphi 0, %s199
      %s216 = sphi 0, %s200
      %s222 = sphi 0, %s224
      %s225 = sphi 0, %s222
      %s226 = sphi 0, %s225
      %s242 = sphi 0, %s226
      %s248 = sphi 0, %s250
      %s251 = sphi 0, %s248
      %s252 = sphi 0, %s251
      %s268 = sphi 0, %s252
      %s274 = sphi 0, %s276
      %s277 = sphi 0, %s274
      %s278 = sphi 0, %s277
      %s294 = sphi 0, %s278
      %s300 = sphi 0, %s302
      %s303 = sphi 0, %s300
      %s304 = sphi 0, %s303
      %s320 = sphi 0, %s304
      %s326 = sphi 0, %s328
      %s329 = sphi 0, %s326
      %s330 = sphi 0, %s329
      %s346 = sphi 0, %s330
      %s352 = sphi 0, %s354
      %s355 = sphi 0, %s352
      %s356 = sphi 0, %s355
      %s372 = sphi 0, %s356
      %s378 = sphi 0, %s380
      %s381 = sphi 0, %s378
      %s382 = sphi 0, %s381
      %s398 = sphi 0, %s382
      %s404 = sphi 0, %s406
      %s407 = sphi 0, %s404
      %s408 = sphi 0, %s407
      %s424 = sphi 0, %s408
    $region4: #{tpu_custom_call.1} parent=1 // loop_header_branch
      %26 = sbr.rel (%p24) target = $region8
    $region5: #{tpu_custom_call.1} parent=1 // loop_body
      %s28 = ssub.s32 %s23, 1
      %s29 = ssub.s32 %s23, 2
      %s36 = sadd.s32 1, %s31
      %p37 = scmp.ge.s32.totalorder %s36, 2
      %s38 = scalar_select %p37, 0, %s36
      %s39 = sadd.s32 1, %s30
      %s40 = scalar_select %p37, %s39, %s30
      %p41 = scmp.ge.s32.totalorder %s40, 2
      %s42 = scalar_select %p41, 0, %s40
      %s43 = ssub.s32 %s30, %s42
      %p44 = scmp.eq.s32.totalorder %s43, 0
      %s46 = sadd.s32 %s45, 1
      %s47 = scalar_select %p44, %s45, %s46
      %p50 = pneg %p44
      %p51 = scmp.eq.s32.totalorder %s23, 3
      %p52 = por %p50, %p51
      %p53 = scmp.ne.s32.totalorder %s45, %s48
      %p54 = scmp.eq.s32.totalorder %s23, 0
      %p55 = por %p53, %p54
      %p56 = scmp.ne.s32.totalorder %s45, %s48
      %p57 = scmp.eq.s32.totalorder %s28, 3
      %p58 = por %p56, %p57
      %p59 = scmp.ne.s32.totalorder %s48, %s49
      %p60 = scmp.eq.s32.totalorder %s28, 0
      %p61 = por %p59, %p60
      %p62 = scmp.ne.s32.totalorder %s48, %s49
      %p63 = scmp.eq.s32.totalorder %s29, 3
      %p64 = por %p62, %p63
      %p66 = scmp.ne.s32.totalorder %s49, %s65
      %p67 = scmp.eq.s32.totalorder %s29, 0
      %p68 = por %p66, %p67
      %s70 = sadd.s32 %s69, 1
      %p73 = scmp.eq.s32.totalorder %s23, 3
      %p74 = scmp.ne.s32.totalorder %s69, %s71
      %p75 = scmp.eq.s32.totalorder %s23, 0
      %p76 = por %p74, %p75
      %p77 = scmp.ne.s32.totalorder %s69, %s71
      %p78 = scmp.eq.s32.totalorder %s28, 3
      %p79 = por %p77, %p78
      %p80 = scmp.ne.s32.totalorder %s71, %s72
      %p81 = scmp.eq.s32.totalorder %s28, 0
      %p82 = por %p80, %p81
      %p83 = scmp.ne.s32.totalorder %s71, %s72
      %p84 = scmp.eq.s32.totalorder %s29, 3
      %p85 = por %p83, %p84
      %p87 = scmp.ne.s32.totalorder %s72, %s86
      %p88 = scmp.eq.s32.totalorder %s29, 0
      %p89 = por %p87, %p88
      %s90 = ssub.s32 %s31, %s38
      %p91 = scmp.eq.s32.totalorder %s90, 0
      %s93 = sadd.s32 %s92, 1
      %s94 = scalar_select %p91, %s92, %s93
      %p97 = pneg %p91
      %p98 = scmp.eq.s32.totalorder %s23, 3
      %p99 = por %p97, %p98
      %p100 = scmp.ne.s32.totalorder %s92, %s95
      %p101 = scmp.eq.s32.totalorder %s23, 0
      %p102 = por %p100, %p101
      %p103 = scmp.ne.s32.totalorder %s92, %s95
      %p104 = scmp.eq.s32.totalorder %s28, 3
      %p105 = por %p103, %p104
      %p106 = scmp.ne.s32.totalorder %s95, %s96
      %p107 = scmp.eq.s32.totalorder %s28, 0
      %p108 = por %p106, %p107
      %p109 = scmp.ne.s32.totalorder %s95, %s96
      %p110 = scmp.eq.s32.totalorder %s29, 3
      %p111 = por %p109, %p110
      %p113 = scmp.ne.s32.totalorder %s96, %s112
      %p114 = scmp.eq.s32.totalorder %s29, 0
      %p115 = por %p113, %p114
      %s116 = ssub.s32 %s31, %s38
      %p117 = scmp.eq.s32.totalorder %s116, 0
      %s119 = sadd.s32 %s118, 1
      %s120 = scalar_select %p117, %s118, %s119
      %p123 = pneg %p117
      %p124 = scmp.eq.s32.totalorder %s23, 3
      %p125 = por %p123, %p124
      %p126 = scmp.ne.s32.totalorder %s118, %s121
      %p127 = scmp.eq.s32.totalorder %s23, 0
      %p128 = por %p126, %p127
      %p129 = scmp.ne.s32.totalorder %s118, %s121
      %p130 = scmp.eq.s32.totalorder %s28, 3
      %p131 = por %p129, %p130
      %p132 = scmp.ne.s32.totalorder %s121, %s122
      %p133 = scmp.eq.s32.totalorder %s28, 0
      %p134 = por %p132, %p133
      %p135 = scmp.ne.s32.totalorder %s121, %s122
      %p136 = scmp.eq.s32.totalorder %s29, 3
      %p137 = por %p135, %p136
      %p139 = scmp.ne.s32.totalorder %s122, %s138
      %p140 = scmp.eq.s32.totalorder %s29, 0
      %p141 = por %p139, %p140
      %s142 = ssub.s32 %s31, %s38
      %p143 = scmp.eq.s32.totalorder %s142, 0
      %s145 = sadd.s32 %s144, 1
      %s146 = scalar_select %p143, %s144, %s145
      %p149 = pneg %p143
      %p150 = scmp.eq.s32.totalorder %s23, 3
      %p151 = por %p149, %p150
      %p152 = scmp.ne.s32.totalorder %s144, %s147
      %p153 = scmp.eq.s32.totalorder %s23, 0
      %p154 = por %p152, %p153
      %p155 = scmp.ne.s32.totalorder %s144, %s147
      %p156 = scmp.eq.s32.totalorder %s28, 3
      %p157 = por %p155, %p156
      %p158 = scmp.ne.s32.totalorder %s147, %s148
      %p159 = scmp.eq.s32.totalorder %s28, 0
      %p160 = por %p158, %p159
      %p161 = scmp.ne.s32.totalorder %s147, %s148
      %p162 = scmp.eq.s32.totalorder %s29, 3
      %p163 = por %p161, %p162
      %p165 = scmp.ne.s32.totalorder %s148, %s164
      %p166 = scmp.eq.s32.totalorder %s29, 0
      %p167 = por %p165, %p166
      %s168 = ssub.s32 %s31, %s38
      %p169 = scmp.eq.s32.totalorder %s168, 0
      %s171 = sadd.s32 %s170, 1
      %s172 = scalar_select %p169, %s170, %s171
      %p175 = pneg %p169
      %p176 = scmp.eq.s32.totalorder %s23, 3
      %p177 = por %p175, %p176
      %p178 = scmp.ne.s32.totalorder %s170, %s173
      %p179 = scmp.eq.s32.totalorder %s23, 0
      %p180 = por %p178, %p179
      %p181 = scmp.ne.s32.totalorder %s170, %s173
      %p182 = scmp.eq.s32.totalorder %s28, 3
      %p183 = por %p181, %p182
      %p184 = scmp.ne.s32.totalorder %s173, %s174
      %p185 = scmp.eq.s32.totalorder %s28, 0
      %p186 = por %p184, %p185
      %p187 = scmp.ne.s32.totalorder %s173, %s174
      %p188 = scmp.eq.s32.totalorder %s29, 3
      %p189 = por %p187, %p188
      %p191 = scmp.ne.s32.totalorder %s174, %s190
      %p192 = scmp.eq.s32.totalorder %s29, 0
      %p193 = por %p191, %p192
      %s194 = ssub.s32 %s31, %s38
      %p195 = scmp.eq.s32.totalorder %s194, 0
      %s197 = sadd.s32 %s196, 1
      %s198 = scalar_select %p195, %s196, %s197
      %p201 = pneg %p195
      %p202 = scmp.eq.s32.totalorder %s23, 3
      %p203 = por %p201, %p202
      %p204 = scmp.ne.s32.totalorder %s196, %s199
      %p205 = scmp.eq.s32.totalorder %s23, 0
      %p206 = por %p204, %p205
      %p207 = scmp.ne.s32.totalorder %s196, %s199
      %p208 = scmp.eq.s32.totalorder %s28, 3
      %p209 = por %p207, %p208
      %p210 = scmp.ne.s32.totalorder %s199, %s200
      %p211 = scmp.eq.s32.totalorder %s28, 0
      %p212 = por %p210, %p211
      %p213 = scmp.ne.s32.totalorder %s199, %s200
      %p214 = scmp.eq.s32.totalorder %s29, 3
      %p215 = por %p213, %p214
      %p217 = scmp.ne.s32.totalorder %s200, %s216
      %p218 = scmp.eq.s32.totalorder %s29, 0
      %p219 = por %p217, %p218
      %s220 = ssub.s32 %s31, %s38
      %p221 = scmp.eq.s32.totalorder %s220, 0
      %s223 = sadd.s32 %s222, 1
      %s224 = scalar_select %p221, %s222, %s223
      %p227 = pneg %p221
      %p228 = scmp.eq.s32.totalorder %s23, 3
      %p229 = por %p227, %p228
      %p230 = scmp.ne.s32.totalorder %s222, %s225
      %p231 = scmp.eq.s32.totalorder %s23, 0
      %p232 = por %p230, %p231
      %p233 = scmp.ne.s32.totalorder %s222, %s225
      %p234 = scmp.eq.s32.totalorder %s28, 3
      %p235 = por %p233, %p234
      %p236 = scmp.ne.s32.totalorder %s225, %s226
      %p237 = scmp.eq.s32.totalorder %s28, 0
      %p238 = por %p236, %p237
      %p239 = scmp.ne.s32.totalorder %s225, %s226
      %p240 = scmp.eq.s32.totalorder %s29, 3
      %p241 = por %p239, %p240
      %p243 = scmp.ne.s32.totalorder %s226, %s242
      %p244 = scmp.eq.s32.totalorder %s29, 0
      %p245 = por %p243, %p244
      %s246 = ssub.s32 %s31, %s38
      %p247 = scmp.eq.s32.totalorder %s246, 0
      %s249 = sadd.s32 %s248, 1
      %s250 = scalar_select %p247, %s248, %s249
      %p253 = pneg %p247
      %p254 = scmp.eq.s32.totalorder %s23, 3
      %p255 = por %p253, %p254
      %p256 = scmp.ne.s32.totalorder %s248, %s251
      %p257 = scmp.eq.s32.totalorder %s23, 0
      %p258 = por %p256, %p257
      %p259 = scmp.ne.s32.totalorder %s248, %s251
      %p260 = scmp.eq.s32.totalorder %s28, 3
      %p261 = por %p259, %p260
      %p262 = scmp.ne.s32.totalorder %s251, %s252
      %p263 = scmp.eq.s32.totalorder %s28, 0
      %p264 = por %p262, %p263
      %p265 = scmp.ne.s32.totalorder %s251, %s252
      %p266 = scmp.eq.s32.totalorder %s29, 3
      %p267 = por %p265, %p266
      %p269 = scmp.ne.s32.totalorder %s252, %s268
      %p270 = scmp.eq.s32.totalorder %s29, 0
      %p271 = por %p269, %p270
      %s272 = ssub.s32 %s31, %s38
      %p273 = scmp.eq.s32.totalorder %s272, 0
      %s275 = sadd.s32 %s274, 1
      %s276 = scalar_select %p273, %s274, %s275
      %p279 = pneg %p273
      %p280 = scmp.eq.s32.totalorder %s23, 3
      %p281 = por %p279, %p280
      %p282 = scmp.ne.s32.totalorder %s274, %s277
      %p283 = scmp.eq.s32.totalorder %s23, 0
      %p284 = por %p282, %p283
      %p285 = scmp.ne.s32.totalorder %s274, %s277
      %p286 = scmp.eq.s32.totalorder %s28, 3
      %p287 = por %p285, %p286
      %p288 = scmp.ne.s32.totalorder %s277, %s278
      %p289 = scmp.eq.s32.totalorder %s28, 0
      %p290 = por %p288, %p289
      %p291 = scmp.ne.s32.totalorder %s277, %s278
      %p292 = scmp.eq.s32.totalorder %s29, 3
      %p293 = por %p291, %p292
      %p295 = scmp.ne.s32.totalorder %s278, %s294
      %p296 = scmp.eq.s32.totalorder %s29, 0
      %p297 = por %p295, %p296
      %s298 = ssub.s32 %s31, %s38
      %p299 = scmp.eq.s32.totalorder %s298, 0
      %s301 = sadd.s32 %s300, 1
      %s302 = scalar_select %p299, %s300, %s301
      %p305 = pneg %p299
      %p306 = scmp.eq.s32.totalorder %s23, 3
      %p307 = por %p305, %p306
      %p308 = scmp.ne.s32.totalorder %s300, %s303
      %p309 = scmp.eq.s32.totalorder %s23, 0
      %p310 = por %p308, %p309
      %p311 = scmp.ne.s32.totalorder %s300, %s303
      %p312 = scmp.eq.s32.totalorder %s28, 3
      %p313 = por %p311, %p312
      %p314 = scmp.ne.s32.totalorder %s303, %s304
      %p315 = scmp.eq.s32.totalorder %s28, 0
      %p316 = por %p314, %p315
      %p317 = scmp.ne.s32.totalorder %s303, %s304
      %p318 = scmp.eq.s32.totalorder %s29, 3
      %p319 = por %p317, %p318
      %p321 = scmp.ne.s32.totalorder %s304, %s320
      %p322 = scmp.eq.s32.totalorder %s29, 0
      %p323 = por %p321, %p322
      %s324 = ssub.s32 %s31, %s38
      %p325 = scmp.eq.s32.totalorder %s324, 0
      %s327 = sadd.s32 %s326, 1
      %s328 = scalar_select %p325, %s326, %s327
      %p331 = pneg %p325
      %p332 = scmp.eq.s32.totalorder %s23, 3
      %p333 = por %p331, %p332
      %p334 = scmp.ne.s32.totalorder %s326, %s329
      %p335 = scmp.eq.s32.totalorder %s23, 0
      %p336 = por %p334, %p335
      %p337 = scmp.ne.s32.totalorder %s326, %s329
      %p338 = scmp.eq.s32.totalorder %s28, 3
      %p339 = por %p337, %p338
      %p340 = scmp.ne.s32.totalorder %s329, %s330
      %p341 = scmp.eq.s32.totalorder %s28, 0
      %p342 = por %p340, %p341
      %p343 = scmp.ne.s32.totalorder %s329, %s330
      %p344 = scmp.eq.s32.totalorder %s29, 3
      %p345 = por %p343, %p344
      %p347 = scmp.ne.s32.totalorder %s330, %s346
      %p348 = scmp.eq.s32.totalorder %s29, 0
      %p349 = por %p347, %p348
      %s350 = ssub.s32 %s31, %s38
      %p351 = scmp.eq.s32.totalorder %s350, 0
      %s353 = sadd.s32 %s352, 1
      %s354 = scalar_select %p351, %s352, %s353
      %p357 = pneg %p351
      %p358 = scmp.eq.s32.totalorder %s23, 3
      %p359 = por %p357, %p358
      %p360 = scmp.ne.s32.totalorder %s352, %s355
      %p361 = scmp.eq.s32.totalorder %s23, 0
      %p362 = por %p360, %p361
      %p363 = scmp.ne.s32.totalorder %s352, %s355
      %p364 = scmp.eq.s32.totalorder %s28, 3
      %p365 = por %p363, %p364
      %p366 = scmp.ne.s32.totalorder %s355, %s356
      %p367 = scmp.eq.s32.totalorder %s28, 0
      %p368 = por %p366, %p367
      %p369 = scmp.ne.s32.totalorder %s355, %s356
      %p370 = scmp.eq.s32.totalorder %s29, 3
      %p371 = por %p369, %p370
      %p373 = scmp.ne.s32.totalorder %s356, %s372
      %p374 = scmp.eq.s32.totalorder %s29, 0
      %p375 = por %p373, %p374
      %s376 = ssub.s32 %s31, %s38
      %p377 = scmp.eq.s32.totalorder %s376, 0
      %s379 = sadd.s32 %s378, 1
      %s380 = scalar_select %p377, %s378, %s379
      %p383 = pneg %p377
      %p384 = scmp.eq.s32.totalorder %s23, 3
      %p385 = por %p383, %p384
      %p386 = scmp.ne.s32.totalorder %s378, %s381
      %p387 = scmp.eq.s32.totalorder %s23, 0
      %p388 = por %p386, %p387
      %p389 = scmp.ne.s32.totalorder %s378, %s381
      %p390 = scmp.eq.s32.totalorder %s28, 3
      %p391 = por %p389, %p390
      %p392 = scmp.ne.s32.totalorder %s381, %s382
      %p393 = scmp.eq.s32.totalorder %s28, 0
      %p394 = por %p392, %p393
      %p395 = scmp.ne.s32.totalorder %s381, %s382
      %p396 = scmp.eq.s32.totalorder %s29, 3
      %p397 = por %p395, %p396
      %p399 = scmp.ne.s32.totalorder %s382, %s398
      %p400 = scmp.eq.s32.totalorder %s29, 0
      %p401 = por %p399, %p400
      %s402 = ssub.s32 %s30, %s42
      %p403 = scmp.eq.s32.totalorder %s402, 0
      %s405 = sadd.s32 %s404, 1
      %s406 = scalar_select %p403, %s404, %s405
      %p409 = pneg %p403
      %p410 = scmp.eq.s32.totalorder %s23, 3
      %p411 = por %p409, %p410
      %p412 = scmp.ne.s32.totalorder %s404, %s407
      %p413 = scmp.eq.s32.totalorder %s23, 0
      %p414 = por %p412, %p413
      %p415 = scmp.ne.s32.totalorder %s404, %s407
      %p416 = scmp.eq.s32.totalorder %s28, 3
      %p417 = por %p415, %p416
      %p418 = scmp.ne.s32.totalorder %s407, %s408
      %p419 = scmp.eq.s32.totalorder %s28, 0
      %p420 = por %p418, %p419
      %p421 = scmp.ne.s32.totalorder %s407, %s408
      %p422 = scmp.eq.s32.totalorder %s29, 3
      %p423 = por %p421, %p422
      %p425 = scmp.ne.s32.totalorder %s408, %s424
      %p426 = scmp.eq.s32.totalorder %s29, 0
      %p427 = por %p425, %p426
      %p428 = scmp.le.s32.totalorder 1, %s23
      %p429 = scmp.lt.s32.totalorder %s23, 5
      %p430 = pnand %p428, %p429
      %p431 = pneg %p430
      // Predicated region
      $region9: #{tpu_custom_call.1} parent=5 // pred_check
        _
      $region10: #{tpu_custom_call.1} parent=5 // pred_check_branch
        %433 = sbr.rel (%p430) target = $region12
      $region11: #{tpu_custom_call.1} parent=5 // pred_region
        %s434 = ssub.s32 %s23, 1
        // Predicated region
        $region13: #{tpu_custom_call.1} parent=11 // pred_check
          %p435 = pneg %p82
        $region14: #{tpu_custom_call.1} parent=11 // pred_check_branch
          %437 = sbr.rel (%p435) target = $region16
        $region15: #{tpu_custom_call.1} parent=11 // pred_region
          _
        $region16: #{tpu_custom_call.1} parent=11 // pred_fallthru
          _
      $region12: #{tpu_custom_call.1} parent=5 // pred_fallthru
        _
      %p438 = scmp.lt.s32.totalorder %s23, 4
      // Predicated region
      $region17: #{tpu_custom_call.1} parent=5 // pred_check
        %p439 = pneg %p438
      $region18: #{tpu_custom_call.1} parent=5 // pred_check_branch
        %441 = sbr.rel (%p439) target = $region20
      $region19: #{tpu_custom_call.1} parent=5 // pred_region
        // Predicated region
        $region21: #{tpu_custom_call.1} parent=19 // pred_check
          %p442 = pneg %p55
        $region22: #{tpu_custom_call.1} parent=19 // pred_check_branch
          %444 = sbr.rel (%p442) target = $region24
        $region23: #{tpu_custom_call.1} parent=19 // pred_region
          %p445 = scmp.lt.s32.totalorder %s30, 1
          %s446 = scalar_select %p445, %s30, 1
          %s447 = smul.addr %s446, 8
          %s448 = scalar_lea.vmem %s0, %s447
        $region24: #{tpu_custom_call.1} parent=19 // pred_fallthru
          _
        // Predicated region
        $region25: #{tpu_custom_call.1} parent=19 // pred_check
          %p449 = pneg %p102
        $region26: #{tpu_custom_call.1} parent=19 // pred_check_branch
          %451 = sbr.rel (%p449) target = $region28
        $region27: #{tpu_custom_call.1} parent=19 // pred_region
          %p452 = scmp.lt.s32.totalorder %s31, 1
          %s453 = scalar_select %p452, %s31, 1
          %s454 = scalar_lea.vmem %s2, %s453
        $region28: #{tpu_custom_call.1} parent=19 // pred_fallthru
          _
        // Predicated region
        $region29: #{tpu_custom_call.1} parent=19 // pred_check
          %p455 = pneg %p128
        $region30: #{tpu_custom_call.1} parent=19 // pred_check_branch
          %457 = sbr.rel (%p455) target = $region32
        $region31: #{tpu_custom_call.1} parent=19 // pred_region
          %p458 = scmp.lt.s32.totalorder %s31, 1
          %s459 = scalar_select %p458, %s31, 1
          %s460 = scalar_lea.vmem %s3, %s459
        $region32: #{tpu_custom_call.1} parent=19 // pred_fallthru
          _
        // Predicated region
        $region33: #{tpu_custom_call.1} parent=19 // pred_check
          %p461 = pneg %p154
        $region34: #{tpu_custom_call.1} parent=19 // pred_check_branch
          %463 = sbr.rel (%p461) target = $region36
        $region35: #{tpu_custom_call.1} parent=19 // pred_region
          %p464 = scmp.lt.s32.totalorder %s31, 1
          %s465 = scalar_select %p464, %s31, 1
          %s466 = smul.addr %s465, 4
          %s467 = smul.addr %s466, 4
          %s468 = scalar_lea.vmem %s4, %s467
        $region36: #{tpu_custom_call.1} parent=19 // pred_fallthru
          _
        // Predicated region
        $region37: #{tpu_custom_call.1} parent=19 // pred_check
          %p469 = pneg %p180
        $region38: #{tpu_custom_call.1} parent=19 // pred_check_branch
          %471 = sbr.rel (%p469) target = $region40
        $region39: #{tpu_custom_call.1} parent=19 // pred_region
          %p472 = scmp.lt.s32.totalorder %s31, 1
          %s473 = scalar_select %p472, %s31, 1
          %s474 = scalar_lea.vmem %s5, %s473
        $region40: #{tpu_custom_call.1} parent=19 // pred_fallthru
          _
        // Predicated region
        $region41: #{tpu_custom_call.1} parent=19 // pred_check
          %p475 = pneg %p206
        $region42: #{tpu_custom_call.1} parent=19 // pred_check_branch
          %477 = sbr.rel (%p475) target = $region44
        $region43: #{tpu_custom_call.1} parent=19 // pred_region
          %p478 = scmp.lt.s32.totalorder %s31, 1
          %s479 = scalar_select %p478, %s31, 1
          %s480 = smul.addr %s479, 4
          %s481 = smul.addr %s480, 4
          %s482 = scalar_lea.vmem %s6, %s481
        $region44: #{tpu_custom_call.1} parent=19 // pred_fallthru
          _
        // Predicated region
        $region45: #{tpu_custom_call.1} parent=19 // pred_check
          %p483 = pneg %p232
        $region46: #{tpu_custom_call.1} parent=19 // pred_check_branch
          %485 = sbr.rel (%p483) target = $region48
        $region47: #{tpu_custom_call.1} parent=19 // pred_region
          %p486 = scmp.lt.s32.totalorder %s31, 1
          %s487 = scalar_select %p486, %s31, 1
          %s488 = scalar_lea.vmem %s7, %s487
        $region48: #{tpu_custom_call.1} parent=19 // pred_fallthru
          _
        // Predicated region
        $region49: #{tpu_custom_call.1} parent=19 // pred_check
          %p489 = pneg %p258
        $region50: #{tpu_custom_call.1} parent=19 // pred_check_branch
          %491 = sbr.rel (%p489) target = $region52
        $region51: #{tpu_custom_call.1} parent=19 // pred_region
          %p492 = scmp.lt.s32.totalorder %s31, 1
          %s493 = scalar_select %p492, %s31, 1
          %s494 = scalar_lea.vmem %s8, %s493
        $region52: #{tpu_custom_call.1} parent=19 // pred_fallthru
          _
        // Predicated region
        $region53: #{tpu_custom_call.1} parent=19 // pred_check
          %p495 = pneg %p284
        $region54: #{tpu_custom_call.1} parent=19 // pred_check_branch
          %497 = sbr.rel (%p495) target = $region56
        $region55: #{tpu_custom_call.1} parent=19 // pred_region
          %p498 = scmp.lt.s32.totalorder %s31, 1
          %s499 = scalar_select %p498, %s31, 1
          %s500 = scalar_lea.vmem %s9, %s499
        $region56: #{tpu_custom_call.1} parent=19 // pred_fallthru
          _
        // Predicated region
        $region57: #{tpu_custom_call.1} parent=19 // pred_check
          %p501 = pneg %p310
        $region58: #{tpu_custom_call.1} parent=19 // pred_check_branch
          %503 = sbr.rel (%p501) target = $region60
        $region59: #{tpu_custom_call.1} parent=19 // pred_region
          %p504 = scmp.lt.s32.totalorder %s31, 1
          %s505 = scalar_select %p504, %s31, 1
          %s506 = smul.addr %s505, 4
          %s507 = smul.addr %s506, 4
          %s508 = scalar_lea.vmem %s10, %s507
        $region60: #{tpu_custom_call.1} parent=19 // pred_fallthru
          _
        // Predicated region
        $region61: #{tpu_custom_call.1} parent=19 // pred_check
          %p509 = pneg %p336
        $region62: #{tpu_custom_call.1} parent=19 // pred_check_branch
          %511 = sbr.rel (%p509) target = $region64
        $region63: #{tpu_custom_call.1} parent=19 // pred_region
          %p512 = scmp.lt.s32.totalorder %s31, 1
          %s513 = scalar_select %p512, %s31, 1
          %s514 = scalar_lea.vmem %s11, %s513
        $region64: #{tpu_custom_call.1} parent=19 // pred_fallthru
          _
        // Predicated region
        $region65: #{tpu_custom_call.1} parent=19 // pred_check
          %p515 = pneg %p362
        $region66: #{tpu_custom_call.1} parent=19 // pred_check_branch
          %517 = sbr.rel (%p515) target = $region68
        $region67: #{tpu_custom_call.1} parent=19 // pred_region
          %p518 = scmp.lt.s32.totalorder %s31, 1
          %s519 = scalar_select %p518, %s31, 1
          %s520 = smul.addr %s519, 16
          %s521 = smul.addr %s520, 4
          %s522 = scalar_lea.vmem %s12, %s521
        $region68: #{tpu_custom_call.1} parent=19 // pred_fallthru
          _
        // Predicated region
        $region69: #{tpu_custom_call.1} parent=19 // pred_check
          %p523 = pneg %p388
        $region70: #{tpu_custom_call.1} parent=19 // pred_check_branch
          %525 = sbr.rel (%p523) target = $region72
        $region71: #{tpu_custom_call.1} parent=19 // pred_region
          %p526 = scmp.lt.s32.totalorder %s31, 1
          %s527 = scalar_select %p526, %s31, 1
          %s528 = scalar_lea.vmem %s13, %s527
        $region72: #{tpu_custom_call.1} parent=19 // pred_fallthru
          _
      $region20: #{tpu_custom_call.1} parent=5 // pred_fallthru
        _
      %p529 = scmp.le.s32.totalorder 1, %s23
      %p530 = scmp.lt.s32.totalorder %s23, 5
      %p531 = pnand %p529, %p530
      %p532 = pneg %p531
      // Predicated region
      $region73: #{tpu_custom_call.1} parent=5 // pred_check
        _
      $region74: #{tpu_custom_call.1} parent=5 // pred_check_branch
        %534 = sbr.rel (%p531) target = $region76
      $region75: #{tpu_custom_call.1} parent=5 // pred_region
        %s535 = ssub.s32 %s23, 1
        %p536 = scmp.lt.s32.totalorder %s32, 1
        %s537 = scalar_select %p536, %s32, 1
        %s538 = smul.addr %s537, 8
        %s539 = scalar_lea.vmem %s0, %s538
        %p540 = pneg %p61
        %p541 = pneg %p58
        %p542 = pneg %p82
        %p543 = pneg %p79
        %p544 = scmp.lt.s32.totalorder %s33, 1
        %s545 = scalar_select %p544, %s33, 1
        %s546 = scalar_lea.vmem %s2, %s545
        %p547 = pneg %p108
        %p548 = pneg %p105
        %p549 = scmp.lt.s32.totalorder %s33, 1
        %s550 = scalar_select %p549, %s33, 1
        %s551 = scalar_lea.vmem %s3, %s550
        %p552 = pneg %p134
        %p553 = pneg %p131
        %p554 = scmp.lt.s32.totalorder %s33, 1
        %s555 = scalar_select %p554, %s33, 1
        %s556 = smul.addr %s555, 4
        %s557 = smul.addr %s556, 4
        %s558 = scalar_lea.vmem %s4, %s557
        %p559 = pneg %p160
        %p560 = pneg %p157
        %p561 = scmp.lt.s32.totalorder %s33, 1
        %s562 = scalar_select %p561, %s33, 1
        %s563 = scalar_lea.vmem %s5, %s562
        %p564 = pneg %p186
        %p565 = pneg %p183
        %p566 = scmp.lt.s32.totalorder %s33, 1
        %s567 = scalar_select %p566, %s33, 1
        %s568 = smul.addr %s567, 4
        %s569 = smul.addr %s568, 4
        %s570 = scalar_lea.vmem %s6, %s569
        %p571 = pneg %p212
        %p572 = pneg %p209
        %p573 = scmp.lt.s32.totalorder %s33, 1
        %s574 = scalar_select %p573, %s33, 1
        %s575 = scalar_lea.vmem %s7, %s574
        %p576 = pneg %p238
        %p577 = pneg %p235
        %p578 = scmp.lt.s32.totalorder %s33, 1
        %s579 = scalar_select %p578, %s33, 1
        %s580 = scalar_lea.vmem %s8, %s579
        %p581 = pneg %p264
        %p582 = pneg %p261
        %p583 = scmp.lt.s32.totalorder %s33, 1
        %s584 = scalar_select %p583, %s33, 1
        %s585 = scalar_lea.vmem %s9, %s584
        %p586 = pneg %p290
        %p587 = pneg %p287
        %p588 = scmp.lt.s32.totalorder %s33, 1
        %s589 = scalar_select %p588, %s33, 1
        %s590 = smul.addr %s589, 4
        %s591 = smul.addr %s590, 4
        %s592 = scalar_lea.vmem %s10, %s591
        %p593 = pneg %p316
        %p594 = pneg %p313
        %p595 = scmp.lt.s32.totalorder %s33, 1
        %s596 = scalar_select %p595, %s33, 1
        %s597 = scalar_lea.vmem %s11, %s596
        %p598 = pneg %p342
        %p599 = pneg %p339
        %p600 = scmp.lt.s32.totalorder %s33, 1
        %s601 = scalar_select %p600, %s33, 1
        %s602 = smul.addr %s601, 16
        %s603 = smul.addr %s602, 4
        %s604 = scalar_lea.vmem %s12, %s603
        %p605 = pneg %p368
        %p606 = pneg %p365
        %p607 = scmp.lt.s32.totalorder %s33, 1
        %s608 = scalar_select %p607, %s33, 1
        %s609 = scalar_lea.vmem %s13, %s608
        %p610 = pneg %p394
        %p611 = pneg %p391
        %p612 = pneg %p420
        %p613 = pneg %p417
        %s614 = sand.u32 %s407, 1
        %s615 = scalar_lea.sflag [#allocation4], %s614
        %s616 = sand.u32 %s407, 1
        %s617 = smul.addr %s616, 8
        %s618 = scalar_lea.vmem [#allocation3], %s617
        %p619 = scmp.lt.s32.totalorder %s32, 1
        %s620 = scalar_select %p619, %s32, 1
        %s621 = smul.addr %s620, 8
        %s622 = scalar_lea.vmem %s0, %s621
        %p623 = scmp.lt.s32.totalorder %s33, 1
        %s624 = scalar_select %p623, %s33, 1
        %s625 = scalar_lea.vmem %s2, %s624
        %p626 = scmp.lt.s32.totalorder %s33, 1
        %s627 = scalar_select %p626, %s33, 1
        %s628 = scalar_lea.vmem %s3, %s627
        %p629 = scmp.lt.s32.totalorder %s33, 1
        %s630 = scalar_select %p629, %s33, 1
        %s631 = smul.addr %s630, 4
        %s632 = smul.addr %s631, 4
        %s633 = scalar_lea.vmem %s4, %s632
        %p634 = scmp.lt.s32.totalorder %s33, 1
        %s635 = scalar_select %p634, %s33, 1
        %s636 = scalar_lea.vmem %s5, %s635
        %p637 = scmp.lt.s32.totalorder %s33, 1
        %s638 = scalar_select %p637, %s33, 1
        %s639 = smul.addr %s638, 4
        %s640 = smul.addr %s639, 4
        %s641 = scalar_lea.vmem %s6, %s640
        %p642 = scmp.lt.s32.totalorder %s33, 1
        %s643 = scalar_select %p642, %s33, 1
        %s644 = scalar_lea.vmem %s7, %s643
        %p645 = scmp.lt.s32.totalorder %s33, 1
        %s646 = scalar_select %p645, %s33, 1
        %s647 = scalar_lea.vmem %s8, %s646
        %p648 = scmp.lt.s32.totalorder %s33, 1
        %s649 = scalar_select %p648, %s33, 1
        %s650 = scalar_lea.vmem %s9, %s649
        %p651 = scmp.lt.s32.totalorder %s33, 1
        %s652 = scalar_select %p651, %s33, 1
        %s653 = smul.addr %s652, 4
        %s654 = smul.addr %s653, 4
        %s655 = scalar_lea.vmem %s10, %s654
        %p656 = scmp.lt.s32.totalorder %s33, 1
        %s657 = scalar_select %p656, %s33, 1
        %s658 = scalar_lea.vmem %s11, %s657
        %p659 = scmp.lt.s32.totalorder %s33, 1
        %s660 = scalar_select %p659, %s33, 1
        %s661 = smul.addr %s660, 16
        %s662 = smul.addr %s661, 4
        %s663 = scalar_lea.vmem %s12, %s662
        %p664 = scmp.lt.s32.totalorder %s33, 1
        %s665 = scalar_select %p664, %s33, 1
        %s666 = scalar_lea.vmem %s13, %s665
        %p668 = scmp.eq.s32.totalorder %s33, 0
        // Predicated region
        $region77: #{tpu_custom_call.1} parent=75 // pred_check
          %p669 = pneg %p668
        $region78: #{tpu_custom_call.1} parent=75 // pred_check_branch
          %671 = sbr.rel (%p669) target = $region80
        $region79: #{tpu_custom_call.1} parent=75 // pred_region
          %v672 = vld [vmem:[%s622] sm:$0xff]
          %vm673 = vcmask 261120
          %674 = vst.msk [vmem:[%s618] sm:$0xff] %vm673, %v672
        $region80: #{tpu_custom_call.1} parent=75 // pred_fallthru
          _
        %v675 = vld [vmem:[%s618] sm:$0xff]
        %v676 = vld [vmem:[%s1] sm:$0xff]
        %v677 = vld [vmem:[%s625] sm:$0x1]
        %v678 = vld [vmem:[%s628] sm:$0x1]
        %vm679 = vcmask 261120
        %v680 = vsel %vm679, %v675, 0.0
        %681 = vadd.xlane.f32.xlu0 %v680
        %v682 = vpop.xlane.xlu0 %681
        %v683 = vrcp.pop 32.0
        %v684 = vmul.f32 %v682, %v683
        %v685 = vsub.f32 %v675, %v684
        %v686 = vmul.f32 %v685, %v685
        %v687 = vsel %vm679, %v686, 0.0
        %688 = vadd.xlane.f32.xlu0 %v687
        %v689 = vpop.xlane.xlu0 %688
        %v690 = vmul.f32 %v689, %v683
        %v691 = vadd.f32 %v690, 1e-05
        %v692 = vrsqrt.pop %v691
        %v693 = vmul.f32 %v685, %v692
        %v695 = vlaneseq
        %v696 = vshrl.u32 %v695, 7
        %v697 = vsub.s32 0, %v696
        %v698 = vrot.slane %v677, %v697
        %v700 = vmul.f32 %v693, %v698
        %v702 = vlaneseq
        %v703 = vshrl.u32 %v702, 7
        %v704 = vsub.s32 0, %v703
        %v705 = vrot.slane %v678, %v704
        %v707 = vadd.f32 %v700, %v705
        %v708 = vpack.c.bf16 %v707, %v707
        %v709 = vld [vmem:[%s633] sm:$0xf]
        %v710 = vld [vmem:[%s633 + $0x4] sm:$0xf]
        %v711 = vld [vmem:[%s633 + $0x8] sm:$0xf]
        %v712 = vld [vmem:[%s633 + $0xc] sm:$0xf]
        %v713 = vld [vmem:[%s636] sm:$0x1]
        %v715 = vlaneseq
        %v716 = vshrl.u32 %v715, 7
        %v717 = vsub.s32 0, %v716
        %v718 = vrot.slane %v713, %v717
        %v724 = vunpack.c.l.b16 %v709
        %v725 = vunpack.c.l.b16 %v710
        %v726 = vunpack.c.l.b16 %v711
        %v727 = vunpack.c.l.b16 %v712
        %v728 = vpack.c.b16 %v725, %v724
        %v729 = vpack.c.b16 %v727, %v726
        %v733 = vsel %vm679, %v708, 0
        %735 = vmatprep.subr.bf16.mxu0 0
        %736 = vmatpush1.bf16.msra.mxu0 %v728
        %737 = vmatprep.subr.bf16.mxu0 0
        %738 = vmatpush1.bf16.msra.mxu0 %v729
        %739 = vmatprep.subr.bf16.mxu0 0
        %740 = vmatpush1.bf16.msra.mxu0 0
        %741 = vmatprep.subr.bf16.mxu0 0
        %742 = vmatpush1.bf16.msra.mxu0 0
        %743 = vmatprep.subr.bf16.mxu0 0
        %744 = vmatpush1.bf16.msra.mxu0 0
        %745 = vmatprep.subr.bf16.mxu0 0
        %746 = vmatpush1.bf16.msra.mxu0 0
        %747 = vmatprep.subr.bf16.mxu0 0
        %748 = vmatpush1.bf16.msra.mxu0 0
        %749 = vmatprep.subr.bf16.mxu0 0
        %750 = vmatpush1.bf16.msra.mxu0 0
        %751 = vmatprep.subr.bf16.mxu0 0
        %752 = vmatpush1.bf16.msra.mxu0 0
        %753 = vmatprep.subr.bf16.mxu0 0
        %754 = vmatpush1.bf16.msra.mxu0 0
        %755 = vmatprep.subr.bf16.mxu0 0
        %756 = vmatpush1.bf16.msra.mxu0 0
        %757 = vmatprep.subr.bf16.mxu0 0
        %758 = vmatpush1.bf16.msra.mxu0 0
        %759 = vmatprep.subr.bf16.mxu0 0
        %760 = vmatpush1.bf16.msra.mxu0 0
        %761 = vmatprep.subr.bf16.mxu0 0
        %762 = vmatpush1.bf16.msra.mxu0 0
        %763 = vmatprep.subr.bf16.mxu0 0
        %764 = vmatpush1.bf16.msra.mxu0 0
        %765 = vmatprep.subr.bf16.mxu0 0
        %766 = vmatpush1.bf16.msra.mxu0 0
        %767 = vmatprep.mubr.bf16.mxu0 0
        %768 = vmatmul.mubr.bf16.gmra.mrb[0].mxu0 %v733
        %v769 = vpop.f32.mrb[0].mxu0
        %v770 = vadd.f32 %v718, %v769
        %v771 = vpop.f32.mrb[0].mxu0
        %v772 = vpop.f32.mrb[0].mxu0
        %v773 = vpop.f32.mrb[0].mxu0
        %774 = vdwg.mxu0
        %v775 = vmul.f32 %v770, 0.35355338
        %v776 = vpack.c.bf16 %v775, %v775
        %v777 = vpack.c.bf16 %v770, %v770
        %779 = vrot.lane.b32.xlu0 %v777, 96
        %v780 = vpop.permute.xlu0 %779
        %vm781 = vcmask 64512
        %v783 = vsel %vm781, %v776, 0
        %v786 = vsel %vm781, %v780, 0
        %788 = vmatprep.subr.bf16.mxu0 0
        %789 = vmatpush1.bf16.xpose.msra.mxu0 %v786
        %790 = vmatprep.subr.bf16.mxu0 0
        %791 = vmatpush1.bf16.xpose.msra.mxu0 0
        %792 = vmatprep.subr.bf16.mxu0 0
        %793 = vmatpush1.bf16.xpose.msra.mxu0 0
        %794 = vmatprep.subr.bf16.mxu0 0
        %795 = vmatpush1.bf16.xpose.msra.mxu0 0
        %796 = vmatprep.subr.bf16.mxu0 0
        %797 = vmatpush1.bf16.xpose.msra.mxu0 0
        %798 = vmatprep.subr.bf16.mxu0 0
        %799 = vmatpush1.bf16.xpose.msra.mxu0 0
        %800 = vmatprep.subr.bf16.mxu0 0
        %801 = vmatpush1.bf16.xpose.msra.mxu0 0
        %802 = vmatprep.subr.bf16.mxu0 0
        %803 = vmatpush1.bf16.xpose.msra.mxu0 0
        %804 = vmatprep.subr.bf16.mxu0 0
        %805 = vmatpush1.bf16.xpose.msra.mxu0 0
        %806 = vmatprep.subr.bf16.mxu0 0
        %807 = vmatpush1.bf16.xpose.msra.mxu0 0
        %808 = vmatprep.subr.bf16.mxu0 0
        %809 = vmatpush1.bf16.xpose.msra.mxu0 0
        %810 = vmatprep.subr.bf16.mxu0 0
        %811 = vmatpush1.bf16.xpose.msra.mxu0 0
        %812 = vmatprep.subr.bf16.mxu0 0
        %813 = vmatpush1.bf16.xpose.msra.mxu0 0
        %814 = vmatprep.subr.bf16.mxu0 0
        %815 = vmatpush1.bf16.xpose.msra.mxu0 0
        %816 = vmatprep.subr.bf16.mxu0 0
        %817 = vmatpush1.bf16.xpose.msra.mxu0 0
        %818 = vmatprep.subr.bf16.mxu0 0
        %819 = vmatpush1.bf16.xpose.msra.mxu0 0
        %820 = vmatprep.mubr.bf16.mxu0 0
        %821 = vmatmul.mubr.bf16.gmra.mrb[0].mxu0 %v783
        %v822 = vpop.f32.mrb[0].mxu0
        %v823 = vadd.f32 %v676, %v822
        %v824 = vpop.f32.mrb[0].mxu0
        %v825 = vpop.f32.mrb[0].mxu0
        %v826 = vpop.f32.mrb[0].mxu0
        %827 = vdwg.mxu0
        %v828 = vsel %vm781, %v823, -inf
        %829 = vmax.xlane.f32.xlu0 %v828
        %v830 = vpop.xlane.xlu0 %829
        %v831 = vsub.f32 %v823, %v830
        %v832 = vmul.f32 %v831, 1.442695
        %v833 = vpow.pop %v832
        %v834 = vsel %vm781, %v833, 0.0
        %835 = vadd.xlane.f32.xlu0 %v834
        %v836 = vpop.xlane.xlu0 %835
        %v837 = vrcp.pop %v836
        %v838 = vmul.f32 %v833, %v837
        %v839 = vpack.c.bf16 %v838, %v838
        %840 = vrot.lane.b32.xlu0 %v777, 64
        %v841 = vpop.permute.xlu0 %840
        %v843 = vsel %vm781, %v839, 0
        %vm845 = vcmask 1043456
        %v847 = vsel %vm845, %v841, 0
        %849 = vmatprep.subr.bf16.mxu0 0
        %850 = vmatpush1.bf16.msra.mxu0 %v847
        %851 = vmatprep.subr.bf16.mxu0 0
        %852 = vmatpush1.bf16.msra.mxu0 0
        %853 = vmatprep.subr.bf16.mxu0 0
        %854 = vmatpush1.bf16.msra.mxu0 0
        %855 = vmatprep.subr.bf16.mxu0 0
        %856 = vmatpush1.bf16.msra.mxu0 0
        %857 = vmatprep.subr.bf16.mxu0 0
        %858 = vmatpush1.bf16.msra.mxu0 0
        %859 = vmatprep.subr.bf16.mxu0 0
        %860 = vmatpush1.bf16.msra.mxu0 0
        %861 = vmatprep.subr.bf16.mxu0 0
        %862 = vmatpush1.bf16.msra.mxu0 0
        %863 = vmatprep.subr.bf16.mxu0 0
        %864 = vmatpush1.bf16.msra.mxu0 0
        %865 = vmatprep.subr.bf16.mxu0 0
        %866 = vmatpush1.bf16.msra.mxu0 0
        %867 = vmatprep.subr.bf16.mxu0 0
        %868 = vmatpush1.bf16.msra.mxu0 0
        %869 = vmatprep.subr.bf16.mxu0 0
        %870 = vmatpush1.bf16.msra.mxu0 0
        %871 = vmatprep.subr.bf16.mxu0 0
        %872 = vmatpush1.bf16.msra.mxu0 0
        %873 = vmatprep.subr.bf16.mxu0 0
        %874 = vmatpush1.bf16.msra.mxu0 0
        %875 = vmatprep.subr.bf16.mxu0 0
        %876 = vmatpush1.bf16.msra.mxu0 0
        %877 = vmatprep.subr.bf16.mxu0 0
        %878 = vmatpush1.bf16.msra.mxu0 0
        %879 = vmatprep.subr.bf16.mxu0 0
        %880 = vmatpush1.bf16.msra.mxu0 0
        %881 = vmatprep.mubr.bf16.mxu0 0
        %882 = vmatmul.mubr.bf16.gmra.mrb[0].mxu0 %v843
        %v883 = vpop.f32.mrb[0].mxu0
        %v884 = vadd.f32 0.0, %v883
        %v885 = vpop.f32.mrb[0].mxu0
        %v886 = vpop.f32.mrb[0].mxu0
        %v887 = vpop.f32.mrb[0].mxu0
        %888 = vdwg.mxu0
        %889 = vst.msk [vmem:[#allocation2] sm:$0xff] %vm781, %v884
        %891 = vrot.lane.b32.xlu0 %v776, 120
        %v892 = vpop.permute.xlu0 %891
        %893 = vrot.lane.b32.xlu0 %v777, 88
        %v894 = vpop.permute.xlu0 %893
        %v896 = vsel %vm781, %v892, 0
        %v899 = vsel %vm781, %v894, 0
        %901 = vmatprep.subr.bf16.mxu0 0
        %902 = vmatpush1.bf16.xpose.msra.mxu0 %v899
        %903 = vmatprep.subr.bf16.mxu0 0
        %904 = vmatpush1.bf16.xpose.msra.mxu0 0
        %905 = vmatprep.subr.bf16.mxu0 0
        %906 = vmatpush1.bf16.xpose.msra.mxu0 0
        %907 = vmatprep.subr.bf16.mxu0 0
        %908 = vmatpush1.bf16.xpose.msra.mxu0 0
        %909 = vmatprep.subr.bf16.mxu0 0
        %910 = vmatpush1.bf16.xpose.msra.mxu0 0
        %911 = vmatprep.subr.bf16.mxu0 0
        %912 = vmatpush1.bf16.xpose.msra.mxu0 0
        %913 = vmatprep.subr.bf16.mxu0 0
        %914 = vmatpush1.bf16.xpose.msra.mxu0 0
        %915 = vmatprep.subr.bf16.mxu0 0
        %916 = vmatpush1.bf16.xpose.msra.mxu0 0
        %917 = vmatprep.subr.bf16.mxu0 0
        %918 = vmatpush1.bf16.xpose.msra.mxu0 0
        %919 = vmatprep.subr.bf16.mxu0 0
        %920 = vmatpush1.bf16.xpose.msra.mxu0 0
        %921 = vmatprep.subr.bf16.mxu0 0
        %922 = vmatpush1.bf16.xpose.msra.mxu0 0
        %923 = vmatprep.subr.bf16.mxu0 0
        %924 = vmatpush1.bf16.xpose.msra.mxu0 0
        %925 = vmatprep.subr.bf16.mxu0 0
        %926 = vmatpush1.bf16.xpose.msra.mxu0 0
        %927 = vmatprep.subr.bf16.mxu0 0
        %928 = vmatpush1.bf16.xpose.msra.mxu0 0
        %929 = vmatprep.subr.bf16.mxu0 0
        %930 = vmatpush1.bf16.xpose.msra.mxu0 0
        %931 = vmatprep.subr.bf16.mxu0 0
        %932 = vmatpush1.bf16.xpose.msra.mxu0 0
        %933 = vmatprep.mubr.bf16.mxu0 0
        %934 = vmatmul.mubr.bf16.gmra.mrb[0].mxu0 %v896
        %v935 = vpop.f32.mrb[0].mxu0
        %v936 = vadd.f32 %v676, %v935
        %v937 = vpop.f32.mrb[0].mxu0
        %v938 = vpop.f32.mrb[0].mxu0
        %v939 = vpop.f32.mrb[0].mxu0
        %940 = vdwg.mxu0
        %v941 = vsel %vm781, %v936, -inf
        %942 = vmax.xlane.f32.xlu0 %v941
        %v943 = vpop.xlane.xlu0 %942
        %v944 = vsub.f32 %v936, %v943
        %v945 = vmul.f32 %v944, 1.442695
        %v946 = vpow.pop %v945
        %v947 = vsel %vm781, %v946, 0.0
        %948 = vadd.xlane.f32.xlu0 %v947
        %v949 = vpop.xlane.xlu0 %948
        %v950 = vrcp.pop %v949
        %v951 = vmul.f32 %v946, %v950
        %v952 = vpack.c.bf16 %v951, %v951
        %953 = vrot.lane.b32.xlu0 %v777, 56
        %v954 = vpop.permute.xlu0 %953
        %v956 = vsel %vm781, %v952, 0
        %v959 = vsel %vm845, %v954, 0
        %961 = vmatprep.subr.bf16.mxu0 0
        %962 = vmatpush1.bf16.msra.mxu0 %v959
        %963 = vmatprep.subr.bf16.mxu0 0
        %964 = vmatpush1.bf16.msra.mxu0 0
        %965 = vmatprep.subr.bf16.mxu0 0
        %966 = vmatpush1.bf16.msra.mxu0 0
        %967 = vmatprep.subr.bf16.mxu0 0
        %968 = vmatpush1.bf16.msra.mxu0 0
        %969 = vmatprep.subr.bf16.mxu0 0
        %970 = vmatpush1.bf16.msra.mxu0 0
        %971 = vmatprep.subr.bf16.mxu0 0
        %972 = vmatpush1.bf16.msra.mxu0 0
        %973 = vmatprep.subr.bf16.mxu0 0
        %974 = vmatpush1.bf16.msra.mxu0 0
        %975 = vmatprep.subr.bf16.mxu0 0
        %976 = vmatpush1.bf16.msra.mxu0 0
        %977 = vmatprep.subr.bf16.mxu0 0
        %978 = vmatpush1.bf16.msra.mxu0 0
        %979 = vmatprep.subr.bf16.mxu0 0
        %980 = vmatpush1.bf16.msra.mxu0 0
        %981 = vmatprep.subr.bf16.mxu0 0
        %982 = vmatpush1.bf16.msra.mxu0 0
        %983 = vmatprep.subr.bf16.mxu0 0
        %984 = vmatpush1.bf16.msra.mxu0 0
        %985 = vmatprep.subr.bf16.mxu0 0
        %986 = vmatpush1.bf16.msra.mxu0 0
        %987 = vmatprep.subr.bf16.mxu0 0
        %988 = vmatpush1.bf16.msra.mxu0 0
        %989 = vmatprep.subr.bf16.mxu0 0
        %990 = vmatpush1.bf16.msra.mxu0 0
        %991 = vmatprep.subr.bf16.mxu0 0
        %992 = vmatpush1.bf16.msra.mxu0 0
        %993 = vmatprep.mubr.bf16.mxu0 0
        %994 = vmatmul.mubr.bf16.gmra.mrb[0].mxu0 %v956
        %v995 = vpop.f32.mrb[0].mxu0
        %v996 = vadd.f32 0.0, %v995
        %v997 = vpop.f32.mrb[0].mxu0
        %v998 = vpop.f32.mrb[0].mxu0
        %v999 = vpop.f32.mrb[0].mxu0
        %1000 = vdwg.mxu0
        %1002 = vrot.lane.b32.xlu0 %v996, 8
        %v1003 = vpop.permute.xlu0 %1002
        %vm1005 = vcmask 130112
        %1006 = vst.msk [vmem:[#allocation2] sm:$0xff] %vm1005, %v1003
        %1007 = vrot.lane.b32.xlu0 %v776, 112
        %v1008 = vpop.permute.xlu0 %1007
        %1009 = vrot.lane.b32.xlu0 %v777, 80
        %v1010 = vpop.permute.xlu0 %1009
        %v1012 = vsel %vm781, %v1008, 0
        %v1015 = vsel %vm781, %v1010, 0
        %1017 = vmatprep.subr.bf16.mxu0 0
        %1018 = vmatpush1.bf16.xpose.msra.mxu0 %v1015
        %1019 = vmatprep.subr.bf16.mxu0 0
        %1020 = vmatpush1.bf16.xpose.msra.mxu0 0
        %1021 = vmatprep.subr.bf16.mxu0 0
        %1022 = vmatpush1.bf16.xpose.msra.mxu0 0
        %1023 = vmatprep.subr.bf16.mxu0 0
        %1024 = vmatpush1.bf16.xpose.msra.mxu0 0
        %1025 = vmatprep.subr.bf16.mxu0 0
        %1026 = vmatpush1.bf16.xpose.msra.mxu0 0
        %1027 = vmatprep.subr.bf16.mxu0 0
        %1028 = vmatpush1.bf16.xpose.msra.mxu0 0
        %1029 = vmatprep.subr.bf16.mxu0 0
        %1030 = vmatpush1.bf16.xpose.msra.mxu0 0
        %1031 = vmatprep.subr.bf16.mxu0 0
        %1032 = vmatpush1.bf16.xpose.msra.mxu0 0
        %1033 = vmatprep.subr.bf16.mxu0 0
        %1034 = vmatpush1.bf16.xpose.msra.mxu0 0
        %1035 = vmatprep.subr.bf16.mxu0 0
        %1036 = vmatpush1.bf16.xpose.msra.mxu0 0
        %1037 = vmatprep.subr.bf16.mxu0 0
        %1038 = vmatpush1.bf16.xpose.msra.mxu0 0
        %1039 = vmatprep.subr.bf16.mxu0 0
        %1040 = vmatpush1.bf16.xpose.msra.mxu0 0
        %1041 = vmatprep.subr.bf16.mxu0 0
        %1042 = vmatpush1.bf16.xpose.msra.mxu0 0
        %1043 = vmatprep.subr.bf16.mxu0 0
        %1044 = vmatpush1.bf16.xpose.msra.mxu0 0
        %1045 = vmatprep.subr.bf16.mxu0 0
        %1046 = vmatpush1.bf16.xpose.msra.mxu0 0
        %1047 = vmatprep.subr.bf16.mxu0 0
        %1048 = vmatpush1.bf16.xpose.msra.mxu0 0
        %1049 = vmatprep.mubr.bf16.mxu0 0
        %1050 = vmatmul.mubr.bf16.gmra.mrb[0].mxu0 %v1012
        %v1051 = vpop.f32.mrb[0].mxu0
        %v1052 = vadd.f32 %v676, %v1051
        %v1053 = vpop.f32.mrb[0].mxu0
        %v1054 = vpop.f32.mrb[0].mxu0
        %v1055 = vpop.f32.mrb[0].mxu0
        %1056 = vdwg.mxu0
        %v1057 = vsel %vm781, %v1052, -inf
        %1058 = vmax.xlane.f32.xlu0 %v1057
        %v1059 = vpop.xlane.xlu0 %1058
        %v1060 = vsub.f32 %v1052, %v1059
        %v1061 = vmul.f32 %v1060, 1.442695
        %v1062 = vpow.pop %v1061
        %v1063 = vsel %vm781, %v1062, 0.0
        %1064 = vadd.xlane.f32.xlu0 %v1063
        %v1065 = vpop.xlane.xlu0 %1064
        %v1066 = vrcp.pop %v1065
        %v1067 = vmul.f32 %v1062, %v1066
        %v1068 = vpack.c.bf16 %v1067, %v1067
        %1069 = vrot.lane.b32.xlu0 %v777, 48
        %v1070 = vpop.permute.xlu0 %1069
        %v1072 = vsel %vm781, %v1068, 0
        %v1075 = vsel %vm845, %v1070, 0
        %1077 = vmatprep.subr.bf16.mxu0 0
        %1078 = vmatpush1.bf16.msra.mxu0 %v1075
        %1079 = vmatprep.subr.bf16.mxu0 0
        %1080 = vmatpush1.bf16.msra.mxu0 0
        %1081 = vmatprep.subr.bf16.mxu0 0
        %1082 = vmatpush1.bf16.msra.mxu0 0
        %1083 = vmatprep.subr.bf16.mxu0 0
        %1084 = vmatpush1.bf16.msra.mxu0 0
        %1085 = vmatprep.subr.bf16.mxu0 0
        %1086 = vmatpush1.bf16.msra.mxu0 0
        %1087 = vmatprep.subr.bf16.mxu0 0
        %1088 = vmatpush1.bf16.msra.mxu0 0
        %1089 = vmatprep.subr.bf16.mxu0 0
        %1090 = vmatpush1.bf16.msra.mxu0 0
        %1091 = vmatprep.subr.bf16.mxu0 0
        %1092 = vmatpush1.bf16.msra.mxu0 0
        %1093 = vmatprep.subr.bf16.mxu0 0
        %1094 = vmatpush1.bf16.msra.mxu0 0
        %1095 = vmatprep.subr.bf16.mxu0 0
        %1096 = vmatpush1.bf16.msra.mxu0 0
        %1097 = vmatprep.subr.bf16.mxu0 0
        %1098 = vmatpush1.bf16.msra.mxu0 0
        %1099 = vmatprep.subr.bf16.mxu0 0
        %1100 = vmatpush1.bf16.msra.mxu0 0
        %1101 = vmatprep.subr.bf16.mxu0 0
        %1102 = vmatpush1.bf16.msra.mxu0 0
        %1103 = vmatprep.subr.bf16.mxu0 0
        %1104 = vmatpush1.bf16.msra.mxu0 0
        %1105 = vmatprep.subr.bf16.mxu0 0
        %1106 = vmatpush1.bf16.msra.mxu0 0
        %1107 = vmatprep.subr.bf16.mxu0 0
        %1108 = vmatpush1.bf16.msra.mxu0 0
        %1109 = vmatprep.mubr.bf16.mxu0 0
        %1110 = vmatmul.mubr.bf16.gmra.mrb[0].mxu0 %v1072
        %v1111 = vpop.f32.mrb[0].mxu0
        %v1112 = vadd.f32 0.0, %v1111
        %v1113 = vpop.f32.mrb[0].mxu0
        %v1114 = vpop.f32.mrb[0].mxu0
        %v1115 = vpop.f32.mrb[0].mxu0
        %1116 = vdwg.mxu0
        %1118 = vrot.lane.b32.xlu0 %v1112, 16
        %v1119 = vpop.permute.xlu0 %1118
        %vm1121 = vcmask 195712
        %1122 = vst.msk [vmem:[#allocation2] sm:$0xff] %vm1121, %v1119
        %1123 = vrot.lane.b32.xlu0 %v776, 104
        %v1124 = vpop.permute.xlu0 %1123
        %1125 = vrot.lane.b32.xlu0 %v777, 72
        %v1126 = vpop.permute.xlu0 %1125
        %v1128 = vsel %vm781, %v1124, 0
        %v1131 = vsel %vm781, %v1126, 0
        %1133 = vmatprep.subr.bf16.mxu0 0
        %1134 = vmatpush1.bf16.xpose.msra.mxu0 %v1131
        %1135 = vmatprep.subr.bf16.mxu0 0
        %1136 = vmatpush1.bf16.xpose.msra.mxu0 0
        %1137 = vmatprep.subr.bf16.mxu0 0
        %1138 = vmatpush1.bf16.xpose.msra.mxu0 0
        %1139 = vmatprep.subr.bf16.mxu0 0
        %1140 = vmatpush1.bf16.xpose.msra.mxu0 0
        %1141 = vmatprep.subr.bf16.mxu0 0
        %1142 = vmatpush1.bf16.xpose.msra.mxu0 0
        %1143 = vmatprep.subr.bf16.mxu0 0
        %1144 = vmatpush1.bf16.xpose.msra.mxu0 0
        %1145 = vmatprep.subr.bf16.mxu0 0
        %1146 = vmatpush1.bf16.xpose.msra.mxu0 0
        %1147 = vmatprep.subr.bf16.mxu0 0
        %1148 = vmatpush1.bf16.xpose.msra.mxu0 0
        %1149 = vmatprep.subr.bf16.mxu0 0
        %1150 = vmatpush1.bf16.xpose.msra.mxu0 0
        %1151 = vmatprep.subr.bf16.mxu0 0
        %1152 = vmatpush1.bf16.xpose.msra.mxu0 0
        %1153 = vmatprep.subr.bf16.mxu0 0
        %1154 = vmatpush1.bf16.xpose.msra.mxu0 0
        %1155 = vmatprep.subr.bf16.mxu0 0
        %1156 = vmatpush1.bf16.xpose.msra.mxu0 0
        %1157 = vmatprep.subr.bf16.mxu0 0
        %1158 = vmatpush1.bf16.xpose.msra.mxu0 0
        %1159 = vmatprep.subr.bf16.mxu0 0
        %1160 = vmatpush1.bf16.xpose.msra.mxu0 0
        %1161 = vmatprep.subr.bf16.mxu0 0
        %1162 = vmatpush1.bf16.xpose.msra.mxu0 0
        %1163 = vmatprep.subr.bf16.mxu0 0
        %1164 = vmatpush1.bf16.xpose.msra.mxu0 0
        %1165 = vmatprep.mubr.bf16.mxu0 0
        %1166 = vmatmul.mubr.bf16.gmra.mrb[0].mxu0 %v1128
        %v1167 = vpop.f32.mrb[0].mxu0
        %v1168 = vadd.f32 %v676, %v1167
        %v1169 = vpop.f32.mrb[0].mxu0
        %v1170 = vpop.f32.mrb[0].mxu0
        %v1171 = vpop.f32.mrb[0].mxu0
        %1172 = vdwg.mxu0
        %v1173 = vsel %vm781, %v1168, -inf
        %1174 = vmax.xlane.f32.xlu0 %v1173
        %v1175 = vpop.xlane.xlu0 %1174
        %v1176 = vsub.f32 %v1168, %v1175
        %v1177 = vmul.f32 %v1176, 1.442695
        %v1178 = vpow.pop %v1177
        %v1179 = vsel %vm781, %v1178, 0.0
        %1180 = vadd.xlane.f32.xlu0 %v1179
        %v1181 = vpop.xlane.xlu0 %1180
        %v1182 = vrcp.pop %v1181
        %v1183 = vmul.f32 %v1178, %v1182
        %v1184 = vpack.c.bf16 %v1183, %v1183
        %1185 = vrot.lane.b32.xlu0 %v777, 40
        %v1186 = vpop.permute.xlu0 %1185
        %v1188 = vsel %vm781, %v1184, 0
        %v1191 = vsel %vm845, %v1186, 0
        %1193 = vmatprep.subr.bf16.mxu0 0
        %1194 = vmatpush1.bf16.msra.mxu0 %v1191
        %1195 = vmatprep.subr.bf16.mxu0 0
        %1196 = vmatpush1.bf16.msra.mxu0 0
        %1197 = vmatprep.subr.bf16.mxu0 0
        %1198 = vmatpush1.bf16.msra.mxu0 0
        %1199 = vmatprep.subr.bf16.mxu0 0
        %1200 = vmatpush1.bf16.msra.mxu0 0
        %1201 = vmatprep.subr.bf16.mxu0 0
        %1202 = vmatpush1.bf16.msra.mxu0 0
        %1203 = vmatprep.subr.bf16.mxu0 0
        %1204 = vmatpush1.bf16.msra.mxu0 0
        %1205 = vmatprep.subr.bf16.mxu0 0
        %1206 = vmatpush1.bf16.msra.mxu0 0
        %1207 = vmatprep.subr.bf16.mxu0 0
        %1208 = vmatpush1.bf16.msra.mxu0 0
        %1209 = vmatprep.subr.bf16.mxu0 0
        %1210 = vmatpush1.bf16.msra.mxu0 0
        %1211 = vmatprep.subr.bf16.mxu0 0
        %1212 = vmatpush1.bf16.msra.mxu0 0
        %1213 = vmatprep.subr.bf16.mxu0 0
        %1214 = vmatpush1.bf16.msra.mxu0 0
        %1215 = vmatprep.subr.bf16.mxu0 0
        %1216 = vmatpush1.bf16.msra.mxu0 0
        %1217 = vmatprep.subr.bf16.mxu0 0
        %1218 = vmatpush1.bf16.msra.mxu0 0
        %1219 = vmatprep.subr.bf16.mxu0 0
        %1220 = vmatpush1.bf16.msra.mxu0 0
        %1221 = vmatprep.subr.bf16.mxu0 0
        %1222 = vmatpush1.bf16.msra.mxu0 0
        %1223 = vmatprep.subr.bf16.mxu0 0
        %1224 = vmatpush1.bf16.msra.mxu0 0
        %1225 = vmatprep.mubr.bf16.mxu0 0
        %1226 = vmatmul.mubr.bf16.gmra.mrb[0].mxu0 %v1188
        %v1227 = vpop.f32.mrb[0].mxu0
        %v1228 = vadd.f32 0.0, %v1227
        %v1229 = vpop.f32.mrb[0].mxu0
        %v1230 = vpop.f32.mrb[0].mxu0
        %v1231 = vpop.f32.mrb[0].mxu0
        %1232 = vdwg.mxu0
        %1234 = vrot.lane.b32.xlu0 %v1228, 24
        %v1235 = vpop.permute.xlu0 %1234
        %vm1237 = vcmask 261312
        %1238 = vst.msk [vmem:[#allocation2] sm:$0xff] %vm1237, %v1235
        %v1239 = vld [vmem:[#allocation2] sm:$0xff]
        %v1240 = vpack.c.bf16 %v1239, %v1239
        %v1241 = vld [vmem:[%s641] sm:$0xf]
        %v1242 = vld [vmem:[%s641 + $0x4] sm:$0xf]
        %v1243 = vld [vmem:[%s641 + $0x8] sm:$0xf]
        %v1244 = vld [vmem:[%s641 + $0xc] sm:$0xf]
        %v1245 = vld [vmem:[%s644] sm:$0x1]
        %v1247 = vlaneseq
        %v1248 = vshrl.u32 %v1247, 7
        %v1249 = vsub.s32 0, %v1248
        %v1250 = vrot.slane %v1245, %v1249
        %v1256 = vunpack.c.l.b16 %v1241
        %v1257 = vunpack.c.l.b16 %v1242
        %v1258 = vunpack.c.l.b16 %v1243
        %v1259 = vunpack.c.l.b16 %v1244
        %v1260 = vpack.c.b16 %v1257, %v1256
        %v1261 = vpack.c.b16 %v1259, %v1258
        %v1265 = vsel %vm679, %v1240, 0
        %1267 = vmatprep.subr.bf16.mxu0 0
        %1268 = vmatpush1.bf16.msra.mxu0 %v1260
        %1269 = vmatprep.subr.bf16.mxu0 0
        %1270 = vmatpush1.bf16.msra.mxu0 %v1261
        %1271 = vmatprep.subr.bf16.mxu0 0
        %1272 = vmatpush1.bf16.msra.mxu0 0
        %1273 = vmatprep.subr.bf16.mxu0 0
        %1274 = vmatpush1.bf16.msra.mxu0 0
        %1275 = vmatprep.subr.bf16.mxu0 0
        %1276 = vmatpush1.bf16.msra.mxu0 0
        %1277 = vmatprep.subr.bf16.mxu0 0
        %1278 = vmatpush1.bf16.msra.mxu0 0
        %1279 = vmatprep.subr.bf16.mxu0 0
        %1280 = vmatpush1.bf16.msra.mxu0 0
        %1281 = vmatprep.subr.bf16.mxu0 0
        %1282 = vmatpush1.bf16.msra.mxu0 0
        %1283 = vmatprep.subr.bf16.mxu0 0
        %1284 = vmatpush1.bf16.msra.mxu0 0
        %1285 = vmatprep.subr.bf16.mxu0 0
        %1286 = vmatpush1.bf16.msra.mxu0 0
        %1287 = vmatprep.subr.bf16.mxu0 0
        %1288 = vmatpush1.bf16.msra.mxu0 0
        %1289 = vmatprep.subr.bf16.mxu0 0
        %1290 = vmatpush1.bf16.msra.mxu0 0
        %1291 = vmatprep.subr.bf16.mxu0 0
        %1292 = vmatpush1.bf16.msra.mxu0 0
        %1293 = vmatprep.subr.bf16.mxu0 0
        %1294 = vmatpush1.bf16.msra.mxu0 0
        %1295 = vmatprep.subr.bf16.mxu0 0
        %1296 = vmatpush1.bf16.msra.mxu0 0
        %1297 = vmatprep.subr.bf16.mxu0 0
        %1298 = vmatpush1.bf16.msra.mxu0 0
        %1299 = vmatprep.mubr.bf16.mxu0 0
        %1300 = vmatmul.mubr.bf16.gmra.mrb[0].mxu0 %v1265
        %v1301 = vpop.f32.mrb[0].mxu0
        %v1302 = vadd.f32 %v1250, %v1301
        %v1303 = vpop.f32.mrb[0].mxu0
        %v1304 = vpop.f32.mrb[0].mxu0
        %v1305 = vpop.f32.mrb[0].mxu0
        %1306 = vdwg.mxu0
        %v1307 = vadd.f32 %v675, %v1302
        %v1308 = vld [vmem:[%s647] sm:$0x1]
        %v1309 = vld [vmem:[%s650] sm:$0x1]
        %v1310 = vsel %vm679, %v1307, 0.0
        %1311 = vadd.xlane.f32.xlu0 %v1310
        %v1312 = vpop.xlane.xlu0 %1311
        %v1313 = vmul.f32 %v1312, %v683
        %v1314 = vsub.f32 %v1307, %v1313
        %v1315 = vmul.f32 %v1314, %v1314
        %v1316 = vsel %vm679, %v1315, 0.0
        %1317 = vadd.xlane.f32.xlu0 %v1316
        %v1318 = vpop.xlane.xlu0 %1317
        %v1319 = vmul.f32 %v1318, %v683
        %v1320 = vadd.f32 %v1319, 1e-05
        %v1321 = vrsqrt.pop %v1320
        %v1322 = vmul.f32 %v1314, %v1321
        %v1324 = vlaneseq
        %v1325 = vshrl.u32 %v1324, 7
        %v1326 = vsub.s32 0, %v1325
        %v1327 = vrot.slane %v1308, %v1326
        %v1329 = vmul.f32 %v1322, %v1327
        %v1331 = vlaneseq
        %v1332 = vshrl.u32 %v1331, 7
        %v1333 = vsub.s32 0, %v1332
        %v1334 = vrot.slane %v1309, %v1333
        %v1336 = vadd.f32 %v1329, %v1334
        %v1337 = vpack.c.bf16 %v1336, %v1336
        %v1338 = vld [vmem:[%s655] sm:$0xf]
        %v1339 = vld [vmem:[%s655 + $0x4] sm:$0xf]
        %v1340 = vld [vmem:[%s655 + $0x8] sm:$0xf]
        %v1341 = vld [vmem:[%s655 + $0xc] sm:$0xf]
        %v1342 = vld [vmem:[%s658] sm:$0x1]
        %v1344 = vlaneseq
        %v1345 = vshrl.u32 %v1344, 7
        %v1346 = vsub.s32 0, %v1345
        %v1347 = vrot.slane %v1342, %v1346
        %v1353 = vunpack.c.l.b16 %v1338
        %v1354 = vunpack.c.l.b16 %v1339
        %v1355 = vunpack.c.l.b16 %v1340
        %v1356 = vunpack.c.l.b16 %v1341
        %v1357 = vpack.c.b16 %v1354, %v1353
        %v1358 = vpack.c.b16 %v1356, %v1355
        %v1362 = vsel %vm679, %v1337, 0
        %1364 = vmatprep.subr.bf16.mxu0 0
        %1365 = vmatpush1.bf16.msra.mxu0 %v1357
        %1366 = vmatprep.subr.bf16.mxu0 0
        %1367 = vmatpush1.bf16.msra.mxu0 %v1358
        %1368 = vmatprep.subr.bf16.mxu0 0
        %1369 = vmatpush1.bf16.msra.mxu0 0
        %1370 = vmatprep.subr.bf16.mxu0 0
        %1371 = vmatpush1.bf16.msra.mxu0 0
        %1372 = vmatprep.subr.bf16.mxu0 0
        %1373 = vmatpush1.bf16.msra.mxu0 0
        %1374 = vmatprep.subr.bf16.mxu0 0
        %1375 = vmatpush1.bf16.msra.mxu0 0
        %1376 = vmatprep.subr.bf16.mxu0 0
        %1377 = vmatpush1.bf16.msra.mxu0 0
        %1378 = vmatprep.subr.bf16.mxu0 0
        %1379 = vmatpush1.bf16.msra.mxu0 0
        %1380 = vmatprep.subr.bf16.mxu0 0
        %1381 = vmatpush1.bf16.msra.mxu0 0
        %1382 = vmatprep.subr.bf16.mxu0 0
        %1383 = vmatpush1.bf16.msra.mxu0 0
        %1384 = vmatprep.subr.bf16.mxu0 0
        %1385 = vmatpush1.bf16.msra.mxu0 0
        %1386 = vmatprep.subr.bf16.mxu0 0
        %1387 = vmatpush1.bf16.msra.mxu0 0
        %1388 = vmatprep.subr.bf16.mxu0 0
        %1389 = vmatpush1.bf16.msra.mxu0 0
        %1390 = vmatprep.subr.bf16.mxu0 0
        %1391 = vmatpush1.bf16.msra.mxu0 0
        %1392 = vmatprep.subr.bf16.mxu0 0
        %1393 = vmatpush1.bf16.msra.mxu0 0
        %1394 = vmatprep.subr.bf16.mxu0 0
        %1395 = vmatpush1.bf16.msra.mxu0 0
        %1396 = vmatprep.mubr.bf16.mxu0 0
        %1397 = vmatmul.mubr.bf16.gmra.mrb[0].mxu0 %v1362
        %v1398 = vpop.f32.mrb[0].mxu0
        %v1399 = vadd.f32 %v1347, %v1398
        %v1400 = vpop.f32.mrb[0].mxu0
        %v1401 = vpop.f32.mrb[0].mxu0
        %v1402 = vpop.f32.mrb[0].mxu0
        %1403 = vdwg.mxu0
        %v1404 = vmul.f32 %v1399, 1.702
        %v1405 = vxor.u32 %v1404, 2147483648
        %v1406 = vmul.f32 %v1405, 1.442695
        %v1407 = vpow.pop %v1406
        %v1408 = vadd.f32 %v1407, 1.0
        %v1409 = vrcp.pop %v1408
        %v1410 = vmul.f32 1.0, %v1409
        %v1411 = vmul.f32 %v1399, %v1410
        %v1412 = vpack.c.bf16 %v1411, %v1411
        %v1413 = vld [vmem:[%s663] sm:$0xf]
        %v1414 = vld [vmem:[%s663 + $0x4] sm:$0xf]
        %v1415 = vld [vmem:[%s663 + $0x8] sm:$0xf]
        %v1416 = vld [vmem:[%s663 + $0xc] sm:$0xf]
        %v1417 = vld [vmem:[%s663 + $0x10] sm:$0xf]
        %v1418 = vld [vmem:[%s663 + $0x14] sm:$0xf]
        %v1419 = vld [vmem:[%s663 + $0x18] sm:$0xf]
        %v1420 = vld [vmem:[%s663 + $0x1c] sm:$0xf]
        %v1421 = vld [vmem:[%s663 + $0x20] sm:$0xf]
        %v1422 = vld [vmem:[%s663 + $0x24] sm:$0xf]
        %v1423 = vld [vmem:[%s663 + $0x28] sm:$0xf]
        %v1424 = vld [vmem:[%s663 + $0x2c] sm:$0xf]
        %v1425 = vld [vmem:[%s663 + $0x30] sm:$0xf]
        %v1426 = vld [vmem:[%s663 + $0x34] sm:$0xf]
        %v1427 = vld [vmem:[%s663 + $0x38] sm:$0xf]
        %v1428 = vld [vmem:[%s663 + $0x3c] sm:$0xf]
        %v1429 = vld [vmem:[%s666] sm:$0x1]
        %v1431 = vlaneseq
        %v1432 = vshrl.u32 %v1431, 7
        %v1433 = vsub.s32 0, %v1432
        %v1434 = vrot.slane %v1429, %v1433
        %v1452 = vunpack.c.l.b16 %v1413
        %v1453 = vunpack.c.l.b16 %v1414
        %v1454 = vunpack.c.l.b16 %v1415
        %v1455 = vunpack.c.l.b16 %v1416
        %v1456 = vunpack.c.l.b16 %v1417
        %v1457 = vunpack.c.l.b16 %v1418
        %v1458 = vunpack.c.l.b16 %v1419
        %v1459 = vunpack.c.l.b16 %v1420
        %v1460 = vunpack.c.l.b16 %v1421
        %v1461 = vunpack.c.l.b16 %v1422
        %v1462 = vunpack.c.l.b16 %v1423
        %v1463 = vunpack.c.l.b16 %v1424
        %v1464 = vunpack.c.l.b16 %v1425
        %v1465 = vunpack.c.l.b16 %v1426
        %v1466 = vunpack.c.l.b16 %v1427
        %v1467 = vunpack.c.l.b16 %v1428
        %v1468 = vpack.c.b16 %v1453, %v1452
        %v1469 = vpack.c.b16 %v1455, %v1454
        %v1470 = vpack.c.b16 %v1457, %v1456
        %v1471 = vpack.c.b16 %v1459, %v1458
        %v1472 = vpack.c.b16 %v1461, %v1460
        %v1473 = vpack.c.b16 %v1463, %v1462
        %v1474 = vpack.c.b16 %v1465, %v1464
        %v1475 = vpack.c.b16 %v1467, %v1466
        %1484 = vmatprep.subr.bf16.mxu0 0
        %1485 = vmatpush1.bf16.msra.mxu0 %v1468
        %1486 = vmatprep.subr.bf16.mxu0 0
        %1487 = vmatpush1.bf16.msra.mxu0 %v1469
        %1488 = vmatprep.subr.bf16.mxu0 0
        %1489 = vmatpush1.bf16.msra.mxu0 %v1470
        %1490 = vmatprep.subr.bf16.mxu0 0
        %1491 = vmatpush1.bf16.msra.mxu0 %v1471
        %1492 = vmatprep.subr.bf16.mxu0 0
        %1493 = vmatpush1.bf16.msra.mxu0 %v1472
        %1494 = vmatprep.subr.bf16.mxu0 0
        %1495 = vmatpush1.bf16.msra.mxu0 %v1473
        %1496 = vmatprep.subr.bf16.mxu0 0
        %1497 = vmatpush1.bf16.msra.mxu0 %v1474
        %1498 = vmatprep.subr.bf16.mxu0 0
        %1499 = vmatpush1.bf16.msra.mxu0 %v1475
        %1500 = vmatprep.subr.bf16.mxu0 0
        %1501 = vmatpush1.bf16.msra.mxu0 0
        %1502 = vmatprep.subr.bf16.mxu0 0
        %1503 = vmatpush1.bf16.msra.mxu0 0
        %1504 = vmatprep.subr.bf16.mxu0 0
        %1505 = vmatpush1.bf16.msra.mxu0 0
        %1506 = vmatprep.subr.bf16.mxu0 0
        %1507 = vmatpush1.bf16.msra.mxu0 0
        %1508 = vmatprep.subr.bf16.mxu0 0
        %1509 = vmatpush1.bf16.msra.mxu0 0
        %1510 = vmatprep.subr.bf16.mxu0 0
        %1511 = vmatpush1.bf16.msra.mxu0 0
        %1512 = vmatprep.subr.bf16.mxu0 0
        %1513 = vmatpush1.bf16.msra.mxu0 0
        %1514 = vmatprep.subr.bf16.mxu0 0
        %1515 = vmatpush1.bf16.msra.mxu0 0
        %1516 = vmatprep.mubr.bf16.mxu0 0
        %1517 = vmatmul.mubr.bf16.gmra.mrb[0].mxu0 %v1412
        %v1518 = vpop.f32.mrb[0].mxu0
        %v1519 = vadd.f32 %v1434, %v1518
        %v1520 = vpop.f32.mrb[0].mxu0
        %v1521 = vpop.f32.mrb[0].mxu0
        %v1522 = vpop.f32.mrb[0].mxu0
        %1523 = vdwg.mxu0
        %v1524 = vadd.f32 %v1307, %v1519
        %1525 = vst.msk [vmem:[%s618] sm:$0xff] %vm679, %v1524
        %s1526 = sand.u32 %s407, 1
        %s1527 = scalar_lea.sflag [#allocation4], %s1526
        %s1528 = sand.u32 %s407, 1
        %s1529 = smul.addr %s1528, 8
        %s1530 = scalar_lea.vmem [#allocation3], %s1529
        // Predicated region
        $region81: #{tpu_custom_call.1} parent=75 // pred_check
          %p1531 = pneg %p417
        $region82: #{tpu_custom_call.1} parent=75 // pred_check_branch
          %1533 = sbr.rel (%p1531) target = $region84
        $region83: #{tpu_custom_call.1} parent=75 // pred_region
          %s1535 = ssub.s32 128, 128
          %1536 = vsyncadd %s1527, %s1535
          %s1537 = smul.addr %s32, 128
          %s1538 = scalar_lea.hbm %s14, %s1537
          %s1540 = sshll.u32 %s1530, 4
          %s1541 = int_to_ptr.vmem [resolvable:$true] %s1540
          %1543 = dma.vmem_to_hbm [thread:$0]  %s1541, 128, %s1538, %s1527
        $region84: #{tpu_custom_call.1} parent=75 // pred_fallthru
          _
      $region76: #{tpu_custom_call.1} parent=5 // pred_fallthru
        _
      %p1544 = scmp.le.s32.totalorder 2, %s23
      // Predicated region
      $region85: #{tpu_custom_call.1} parent=5 // pred_check
        %p1545 = pneg %p1544
      $region86: #{tpu_custom_call.1} parent=5 // pred_check_branch
        %1547 = sbr.rel (%p1545) target = $region88
      $region87: #{tpu_custom_call.1} parent=5 // pred_region
        %s1548 = ssub.s32 %s23, 2
        // Predicated region
        $region89: #{tpu_custom_call.1} parent=87 // pred_check
          %p1549 = pneg %p423
        $region90: #{tpu_custom_call.1} parent=87 // pred_check_branch
          %1551 = sbr.rel (%p1549) target = $region92
        $region91: #{tpu_custom_call.1} parent=87 // pred_region
          %s1552 = sand.u32 %s408, 1
          %s1553 = scalar_lea.sflag [#allocation4], %s1552
          %s1554 = sand.u32 %s408, 1
          %s1555 = smul.addr %s1554, 8
          %s1556 = scalar_lea.vmem [#allocation3], %s1555
          %1557 = dma.done %s1553, 128
        $region92: #{tpu_custom_call.1} parent=87 // pred_fallthru
          _
      $region88: #{tpu_custom_call.1} parent=5 // pred_fallthru
        _
    $region6: #{tpu_custom_call.1} parent=1 // loop_footer
      %s27 = sadd.s32 1, %s23
    $region7: #{tpu_custom_call.1} parent=1 // loop_footer_branch
      %22 = sbr.rel target = $region3
    $region8: #{tpu_custom_call.1} parent=1 // loop_exit
      _
    %1558 = vsyncpa [#allocation4], 1
    %s1559 = scalar_lea.sflag [#allocation4], 1
    %1560 = vsyncpa %s1559, 1

</llo_original>
